<compile_context>
chip_gen: v5e
topology: v5e:2x2
jax: 0.10.0
libtpu: 0.0.40
codegen_flags: <defaults>
</compile_context>

<pallas_src>
import functools

import jax
import jax.numpy as jnp
from jax.experimental import pallas as pl
from jax.experimental.pallas import tpu as pltpu


def _round_up(a: int, b: int) -> int:
    return (a + b - 1) // b * b


def _decoder_kernel(ids_ref,                      # SMEM (N_pad,) int32       [scalar prefetch]
                    emb_hbm,                      # HBM  (V_in, E_pad) f32    (pl.ANY)
                    h0_ref, c0_ref,               # VMEM (N_pad, H_pad) f32
                    w_gate_ref,                   # VMEM (K_pad, 4*H_pad) bf16
                    b_gate_ref,                   # VMEM (1, 4*H_pad) f32
                    w_fc_ref,                     # VMEM (H_pad, tV) bf16     (V-tiled)
                    b_fc_ref,                     # VMEM (1, tV) f32          (V-tiled)
                    pred_ref,                     # VMEM (N_pad, tV) f32      [out, V-tiled]
                    h_new_ref, c_new_ref,         # VMEM (N_pad, H_pad) f32   [out, resident]
                    emb_scratch,                  # VMEM (N_pad, E_pad) f32
                    z_ref,                        # VMEM (N_pad, K_pad) bf16
                    h_state,                      # VMEM (N_pad, H_pad) bf16
                    gather_sem,                   # DMA semaphores (N_pad,)
                    *, emb_dim: int):
    n_pad, k_pad = z_ref.shape
    h_pad = h0_ref.shape[1]
    e = emb_dim

    # ---- recurrent part: gather + LSTM cell update, only on the first V block ----
    @pl.when(pl.program_id(0) == 0)
    def _lstm_step():
        # In-kernel embedding gather: one small row DMA per batch element.
        # Build all descriptors up front so start()/wait() use identical copies.
        copies = [
            pltpu.make_async_copy(
                emb_hbm.at[pl.ds(ids_ref[n], 1)],     # (1, E_pad) row in HBM
                emb_scratch.at[pl.ds(n, 1)],          # (1, E_pad) row in VMEM
                gather_sem.at[n],
            )
            for n in range(n_pad)
        ]
        for cp in copies:
            cp.start()
        for cp in copies:
            cp.wait()

        # Pack the fused LSTM input  z = [emb | h | 0]  (bf16, K_pad lanes).
        z_ref[:, 0:e] = emb_scratch[:, 0:e].astype(jnp.bfloat16)
        copy_w = min(k_pad - e, h_pad)
        z_ref[:, e:e + copy_w] = h0_ref[:, 0:copy_w].astype(jnp.bfloat16)
        if e + copy_w < k_pad:
            # VMEM scratch is not zero-initialised; clear the tail of the contraction dim.
            z_ref[:, e + copy_w:k_pad] = jnp.zeros(
                (n_pad, k_pad - e - copy_w), jnp.bfloat16)

        # One fused gate matmul (MXU, f32 accumulation) + bias.
        gates = jnp.dot(z_ref[...], w_gate_ref[...],
                        preferred_element_type=jnp.float32) + b_gate_ref[...]

        # Gate order matches torch.nn.LSTM: [i, f, g, o]; each gate has a 128-lane slot,
        # so every slice below is lane-aligned and full-vreg wide.
        i_g = jax.nn.sigmoid(gates[:, 0 * h_pad:1 * h_pad])
        f_g = jax.nn.sigmoid(gates[:, 1 * h_pad:2 * h_pad])
        g_g = jnp.tanh(gates[:, 2 * h_pad:3 * h_pad])
        o_g = jax.nn.sigmoid(gates[:, 3 * h_pad:4 * h_pad])

        c_new = f_g * c0_ref[...] + i_g * g_g
        h_new = o_g * jnp.tanh(c_new)

        c_new_ref[...] = c_new
        h_new_ref[...] = h_new
        h_state[...] = h_new.astype(jnp.bfloat16)     # stays resident for all V blocks

    # ---- output projection for this V tile (every grid step, lane-dense store) ----
    pred_ref[...] = (jnp.dot(h_state[...], w_fc_ref[...],
                             preferred_element_type=jnp.float32)
                     + b_fc_ref[...])


def pack_decoder_params(params, *, tv: int = 512):
    """Pad / pack the PyTorch-layout parameters into the kernel's TPU layout (one-time)."""
    emb_tbl = params["embedding"]        # (V_in, E) f32
    w_ih_t = params["w_ih_t"]            # (E, 4H)   (already transposed: x @ W_ih^T)
    w_hh_t = params["w_hh_t"]            # (H, 4H)
    b = params["b"]                      # (1, 4H) = b_ih + b_hh
    w_fc_t = params["w_fc_t"]            # (H, V)
    b_fc = params["b_fc"]                # (1, V)

    v_in, E = emb_tbl.shape
    H = w_hh_t.shape[0]
    V = w_fc_t.shape[1]

    E_pad = _round_up(E, 128)            # lane-dense DMA gather rows
    H_pad = _round_up(H, 128)
    K_pad = _round_up(E + H, 128)        # fused [emb | h] contraction dim
    G_pad = 4 * H_pad                    # one 128-lane slot per gate
    tV = min(_round_up(tv, 128), _round_up(V, 128))
    V_pad = _round_up(V, tV)

    emb_pad = jnp.zeros((v_in, E_pad), jnp.float32).at[:, :E].set(emb_tbl)

    # Stack [W_ih ; W_hh] along the contraction dim; scatter each gate into its 128-lane slot.
    w_gate = jnp.zeros((K_pad, G_pad), jnp.float32)
    b_gate = jnp.zeros((1, G_pad), jnp.float32)
    for g in range(4):
        w_gate = w_gate.at[0:E, g * H_pad:g * H_pad + H].set(w_ih_t[:, g * H:(g + 1) * H])
        w_gate = w_gate.at[E:E + H, g * H_pad:g * H_pad + H].set(w_hh_t[:, g * H:(g + 1) * H])
        b_gate = b_gate.at[0, g * H_pad:g * H_pad + H].set(b[0, g * H:(g + 1) * H])

    w_fc = jnp.zeros((H_pad, V_pad), jnp.float32).at[:H, :V].set(w_fc_t)
    b_fc_p = jnp.zeros((1, V_pad), jnp.float32).at[0, :V].set(b_fc[0])

    return {
        "emb_table": emb_pad,                        # f32, row-gathered from HBM by DMA
        "w_gate": w_gate.astype(jnp.bfloat16),
        "b_gate": b_gate,
        "w_fc": w_fc.astype(jnp.bfloat16),
        "b_fc": b_fc_p,
        "dims": dict(E=E, H=H, V=V, E_pad=E_pad, H_pad=H_pad,
                     K_pad=K_pad, G_pad=G_pad, tV=tV, V_pad=V_pad),
    }


def decoder_forward(x, hidden, cell, packed):
    """x: (N,) int32; hidden/cell: (1, N, H) f32.  Returns (pred, hidden', cell')."""
    d = packed["dims"]
    E, H, V = d["E"], d["H"], d["V"]
    E_pad, H_pad, K_pad, G_pad = d["E_pad"], d["H_pad"], d["K_pad"], d["G_pad"]
    tV, V_pad = d["tV"], d["V_pad"]

    N = x.shape[0]
    N_pad = _round_up(N, 8)              # sublane alignment
    num_v_blocks = V_pad // tV

    ids = jnp.zeros((N_pad,), jnp.int32).at[:N].set(x.astype(jnp.int32))
    h0p = jnp.zeros((N_pad, H_pad), jnp.float32).at[:N, :H].set(hidden[0])
    c0p = jnp.zeros((N_pad, H_pad), jnp.float32).at[:N, :H].set(cell[0])

    kernel = functools.partial(_decoder_kernel, emb_dim=E)

    grid_spec = pltpu.PrefetchScalarGridSpec(
        num_scalar_prefetch=1,
        grid=(num_v_blocks,),
        in_specs=[
            pl.BlockSpec(memory_space=pl.ANY),                         # embedding table (HBM)
            pl.BlockSpec((N_pad, H_pad), lambda j, _ids: (0, 0)),      # h0
            pl.BlockSpec((N_pad, H_pad), lambda j, _ids: (0, 0)),      # c0
            pl.BlockSpec((K_pad, G_pad), lambda j, _ids: (0, 0)),      # fused gate weights
            pl.BlockSpec((1, G_pad), lambda j, _ids: (0, 0)),          # gate bias
            pl.BlockSpec((H_pad, tV), lambda j, _ids: (0, j)),         # fc weights (V-tiled)
            pl.BlockSpec((1, tV), lambda j, _ids: (0, j)),             # fc bias (V-tiled)
        ],
        out_specs=[
            pl.BlockSpec((N_pad, tV), lambda j, _ids: (0, j)),         # pred
            pl.BlockSpec((N_pad, H_pad), lambda j, _ids: (0, 0)),      # h'
            pl.BlockSpec((N_pad, H_pad), lambda j, _ids: (0, 0)),      # c'
        ],
        scratch_shapes=[
            pltpu.VMEM((N_pad, E_pad), jnp.float32),    # gathered embedding rows
            pltpu.VMEM((N_pad, K_pad), jnp.bfloat16),   # fused [emb | h] operand
            pltpu.VMEM((N_pad, H_pad), jnp.bfloat16),   # resident h' for the FC tiles
            pltpu.SemaphoreType.DMA((N_pad,)),
        ],
    )

    pred_p, h_new_p, c_new_p = pl.pallas_call(
        kernel,
        out_shape=(
            jax.ShapeDtypeStruct((N_pad, V_pad), jnp.float32),
            jax.ShapeDtypeStruct((N_pad, H_pad), jnp.float32),
            jax.ShapeDtypeStruct((N_pad, H_pad), jnp.float32),
        ),
        grid_spec=grid_spec,
        compiler_params=pltpu.CompilerParams(
            # V axis must be "arbitrary": blocks j > 0 consume the LSTM state that block 0
            # leaves resident in VMEM scratch (sequential grid on one TensorCore).
            dimension_semantics=("arbitrary",),
            vmem_limit_bytes=32 * 1024 * 1024,
        ),
    )(ids, packed["emb_table"], h0p, c0p,
      packed["w_gate"], packed["b_gate"], packed["w_fc"], packed["b_fc"])

    pred = pred_p[:N, :V]
    h_new = h_new_p[:N, :H][None, :, :]
    c_new = c_new_p[:N, :H][None, :, :]
    return pred, h_new, c_new


def _reference_forward(x, hidden, cell, params):
    """Pure-JAX f32 reference of the PyTorch forward (gate order i,f,g,o)."""
    emb = params["embedding"][x]
    h0, c0 = hidden[0], cell[0]
    gates = emb @ params["w_ih_t"] + h0 @ params["w_hh_t"] + params["b"]
    H = h0.shape[-1]
    i = jax.nn.sigmoid(gates[:, :H])
    f = jax.nn.sigmoid(gates[:, H:2 * H])
    g = jnp.tanh(gates[:, 2 * H:3 * H])
    o = jax.nn.sigmoid(gates[:, 3 * H:])
    c_new = f * c0 + i * g
    h_new = o * jnp.tanh(c_new)
    pred = h_new @ params["w_fc_t"] + params["b_fc"]
    return pred, h_new[None], c_new[None]


def make_params(key, input_size, embedding_size, hidden_size, output_size):
    ks = jax.random.split(key, 7)
    scale = 0.1
    return {
        "embedding": scale * jax.random.normal(ks[0], (input_size, embedding_size), jnp.float32),
        "w_ih_t":    scale * jax.random.normal(ks[1], (embedding_size, 4 * hidden_size), jnp.float32),
        "w_hh_t":    scale * jax.random.normal(ks[2], (hidden_size, 4 * hidden_size), jnp.float32),
        "b":         scale * jax.random.normal(ks[3], (1, 4 * hidden_size), jnp.float32),
        "w_fc_t":    scale * jax.random.normal(ks[4], (hidden_size, output_size), jnp.float32),
        "b_fc":      scale * jax.random.normal(ks[5], (1, output_size), jnp.float32),
    }


if __name__ == "__main__":
    # Small, deterministic shapes consistent with the module's forward.
    input_size = 40       # vocabulary size (embedding rows)
    embedding_size = 16
    hidden_size = 32
    output_size = 40      # len(vocabulary)
    num_layers = 1
    batch = 8

    key = jax.random.PRNGKey(0)
    k_tok, k_h, k_c, k_par = jax.random.split(key, 4)

    params = make_params(k_par, input_size, embedding_size, hidden_size, output_size)
    packed = pack_decoder_params(params)

    x = jax.random.randint(k_tok, (batch,), 0, input_size, dtype=jnp.int32)
    hidden = 0.1 * jax.random.normal(k_h, (num_layers, batch, hidden_size), jnp.float32)
    cell = 0.1 * jax.random.normal(k_c, (num_layers, batch, hidden_size), jnp.float32)

    # TODO(synk): training-mode dropout (nn.Dropout(p)) not implemented (identity at inference).
    fwd = jax.jit(functools.partial(decoder_forward, packed=packed))
    pred, h_new, c_new = fwd(x, hidden, cell)
    jax.block_until_ready((pred, h_new, c_new))

    # Sanity check vs. pure-JAX f32 reference (bf16 matmul operands => looser tolerance).
    pred_r, h_r, c_r = _reference_forward(x, hidden, cell, params)
    assert pred.shape == (batch, output_size)
    assert h_new.shape == (num_layers, batch, hidden_size)
    assert c_new.shape == (num_layers, batch, hidden_size)
    assert jnp.allclose(pred, pred_r, atol=1e-2), float(jnp.max(jnp.abs(pred - pred_r)))
    assert jnp.allclose(h_new, h_r, atol=1e-2), float(jnp.max(jnp.abs(h_new - h_r)))
    assert jnp.allclose(c_new, c_r, atol=1e-2), float(jnp.max(jnp.abs(c_new - c_r)))

    print("KERNEL_OK")
</pallas_src>

<mosaic_0001>
module attributes {stable_mosaic.version = 11 : i64} {
  func.func @_decoder_kernel(%arg0: i32, %arg1: memref<8xi32, #tpu.memory_space<smem>>, %arg2: memref<40x128xf32, #tpu.memory_space<any>>, %arg3: memref<8x128xf32, #tpu.memory_space<vmem>>, %arg4: memref<8x128xf32, #tpu.memory_space<vmem>>, %arg5: memref<128x512xbf16, #tpu.memory_space<vmem>>, %arg6: memref<1x512xf32, #tpu.memory_space<vmem>>, %arg7: memref<128x128xbf16, #tpu.memory_space<vmem>>, %arg8: memref<1x128xf32, #tpu.memory_space<vmem>>, %arg9: memref<8x128xf32, #tpu.memory_space<vmem>>, %arg10: memref<8x128xf32, #tpu.memory_space<vmem>>, %arg11: memref<8x128xf32, #tpu.memory_space<vmem>>, %arg12: memref<8x128xf32, #tpu.memory_space<vmem>>, %arg13: memref<8x128xbf16, #tpu.memory_space<vmem>>, %arg14: memref<8x128xbf16, #tpu.memory_space<vmem>>, %arg15: memref<8x!tpu.dma_semaphore, #tpu.memory_space<semaphore_mem>>) attributes {dimension_semantics = [#tpu.dimension_semantics<arbitrary>], iteration_bounds = array<i64: 1>, scalar_prefetch = 1 : i64, scratch_operands = 4 : i64, tpu.core_type = #tpu.core_type<tc>, window_params = [{}, {pipeline_mode = #tpu.pipeline_mode<synchronous>, transform_indices = @transform_1, window_bounds = array<i64: 8, 128>}, {pipeline_mode = #tpu.pipeline_mode<synchronous>, transform_indices = @transform_2, window_bounds = array<i64: 8, 128>}, {pipeline_mode = #tpu.pipeline_mode<synchronous>, transform_indices = @transform_3, window_bounds = array<i64: 128, 512>}, {pipeline_mode = #tpu.pipeline_mode<synchronous>, transform_indices = @transform_4, window_bounds = array<i64: 1, 512>}, {transform_indices = @transform_5, window_bounds = array<i64: 128, 128>}, {transform_indices = @transform_6, window_bounds = array<i64: 1, 128>}, {transform_indices = @transform_7, window_bounds = array<i64: 8, 128>}, {pipeline_mode = #tpu.pipeline_mode<synchronous>, transform_indices = @transform_8, window_bounds = array<i64: 8, 128>}, {pipeline_mode = #tpu.pipeline_mode<synchronous>, transform_indices = @transform_9, window_bounds = array<i64: 8, 128>}]} {
    %c0_i32 = arith.constant 0 : i32
    %0 = arith.cmpi eq, %arg0, %c0_i32 : i32
    %1 = arith.extui %0 : i1 to i32
    %c0_i32_0 = arith.constant 0 : i32
    %2 = arith.cmpi ne, %1, %c0_i32_0 : i32
    scf.if %2 {
      %c0_8 = arith.constant 0 : index
      %10 = memref.load %arg1[%c0_8] : memref<8xi32, #tpu.memory_space<smem>>
      %c1 = arith.constant 1 : index
      %11 = memref.load %arg1[%c1] : memref<8xi32, #tpu.memory_space<smem>>
      %c2 = arith.constant 2 : index
      %12 = memref.load %arg1[%c2] : memref<8xi32, #tpu.memory_space<smem>>
      %c3 = arith.constant 3 : index
      %13 = memref.load %arg1[%c3] : memref<8xi32, #tpu.memory_space<smem>>
      %c4 = arith.constant 4 : index
      %14 = memref.load %arg1[%c4] : memref<8xi32, #tpu.memory_space<smem>>
      %c5 = arith.constant 5 : index
      %15 = memref.load %arg1[%c5] : memref<8xi32, #tpu.memory_space<smem>>
      %c6 = arith.constant 6 : index
      %16 = memref.load %arg1[%c6] : memref<8xi32, #tpu.memory_space<smem>>
      %c7 = arith.constant 7 : index
      %17 = memref.load %arg1[%c7] : memref<8xi32, #tpu.memory_space<smem>>
      %c0_i32_9 = arith.constant 0 : i32
      %c0_i32_10 = arith.constant 0 : i32
      %18 = tpu.memref_slice %arg2[%10, %c0_i32_10] : memref<40x128xf32, #tpu.memory_space<any>> -> memref<1x128xf32, #tpu.memory_space<any>>
      %c0_i32_11 = arith.constant 0 : i32
      %c0_i32_12 = arith.constant 0 : i32
      %19 = tpu.memref_slice %arg12[%c0_i32_11, %c0_i32_12] : memref<8x128xf32, #tpu.memory_space<vmem>> -> memref<1x128xf32, #tpu.memory_space<vmem>>
      %20 = tpu.memref_slice %arg15[%c0_i32_9] : memref<8x!tpu.dma_semaphore, #tpu.memory_space<semaphore_mem>> -> memref<1x!tpu.dma_semaphore, #tpu.memory_space<semaphore_mem>>
      %21 = tpu.memref_squeeze %20 : memref<1x!tpu.dma_semaphore, #tpu.memory_space<semaphore_mem>> -> memref<!tpu.dma_semaphore, #tpu.memory_space<semaphore_mem>>
      tpu.enqueue_dma source(%18 : memref<1x128xf32, #tpu.memory_space<any>>) target(%19 : memref<1x128xf32, #tpu.memory_space<vmem>>) target_semaphore(%21 : memref<!tpu.dma_semaphore, #tpu.memory_space<semaphore_mem>>)
      %c1_i32 = arith.constant 1 : i32
      %c0_i32_13 = arith.constant 0 : i32
      %22 = tpu.memref_slice %arg2[%11, %c0_i32_13] : memref<40x128xf32, #tpu.memory_space<any>> -> memref<1x128xf32, #tpu.memory_space<any>>
      %c1_i32_14 = arith.constant 1 : i32
      %c0_i32_15 = arith.constant 0 : i32
      %23 = tpu.memref_slice %arg12[%c1_i32_14, %c0_i32_15] : memref<8x128xf32, #tpu.memory_space<vmem>> -> memref<1x128xf32, #tpu.memory_space<vmem>>
      %24 = tpu.memref_slice %arg15[%c1_i32] : memref<8x!tpu.dma_semaphore, #tpu.memory_space<semaphore_mem>> -> memref<1x!tpu.dma_semaphore, #tpu.memory_space<semaphore_mem>>
      %25 = tpu.memref_squeeze %24 : memref<1x!tpu.dma_semaphore, #tpu.memory_space<semaphore_mem>> -> memref<!tpu.dma_semaphore, #tpu.memory_space<semaphore_mem>>
      tpu.enqueue_dma source(%22 : memref<1x128xf32, #tpu.memory_space<any>>) target(%23 : memref<1x128xf32, #tpu.memory_space<vmem>>) target_semaphore(%25 : memref<!tpu.dma_semaphore, #tpu.memory_space<semaphore_mem>>)
      %c2_i32 = arith.constant 2 : i32
      %c0_i32_16 = arith.constant 0 : i32
      %26 = tpu.memref_slice %arg2[%12, %c0_i32_16] : memref<40x128xf32, #tpu.memory_space<any>> -> memref<1x128xf32, #tpu.memory_space<any>>
      %c2_i32_17 = arith.constant 2 : i32
      %c0_i32_18 = arith.constant 0 : i32
      %27 = tpu.memref_slice %arg12[%c2_i32_17, %c0_i32_18] : memref<8x128xf32, #tpu.memory_space<vmem>> -> memref<1x128xf32, #tpu.memory_space<vmem>>
      %28 = tpu.memref_slice %arg15[%c2_i32] : memref<8x!tpu.dma_semaphore, #tpu.memory_space<semaphore_mem>> -> memref<1x!tpu.dma_semaphore, #tpu.memory_space<semaphore_mem>>
      %29 = tpu.memref_squeeze %28 : memref<1x!tpu.dma_semaphore, #tpu.memory_space<semaphore_mem>> -> memref<!tpu.dma_semaphore, #tpu.memory_space<semaphore_mem>>
      tpu.enqueue_dma source(%26 : memref<1x128xf32, #tpu.memory_space<any>>) target(%27 : memref<1x128xf32, #tpu.memory_space<vmem>>) target_semaphore(%29 : memref<!tpu.dma_semaphore, #tpu.memory_space<semaphore_mem>>)
      %c3_i32 = arith.constant 3 : i32
      %c0_i32_19 = arith.constant 0 : i32
      %30 = tpu.memref_slice %arg2[%13, %c0_i32_19] : memref<40x128xf32, #tpu.memory_space<any>> -> memref<1x128xf32, #tpu.memory_space<any>>
      %c3_i32_20 = arith.constant 3 : i32
      %c0_i32_21 = arith.constant 0 : i32
      %31 = tpu.memref_slice %arg12[%c3_i32_20, %c0_i32_21] : memref<8x128xf32, #tpu.memory_space<vmem>> -> memref<1x128xf32, #tpu.memory_space<vmem>>
      %32 = tpu.memref_slice %arg15[%c3_i32] : memref<8x!tpu.dma_semaphore, #tpu.memory_space<semaphore_mem>> -> memref<1x!tpu.dma_semaphore, #tpu.memory_space<semaphore_mem>>
      %33 = tpu.memref_squeeze %32 : memref<1x!tpu.dma_semaphore, #tpu.memory_space<semaphore_mem>> -> memref<!tpu.dma_semaphore, #tpu.memory_space<semaphore_mem>>
      tpu.enqueue_dma source(%30 : memref<1x128xf32, #tpu.memory_space<any>>) target(%31 : memref<1x128xf32, #tpu.memory_space<vmem>>) target_semaphore(%33 : memref<!tpu.dma_semaphore, #tpu.memory_space<semaphore_mem>>)
      %c4_i32 = arith.constant 4 : i32
      %c0_i32_22 = arith.constant 0 : i32
      %34 = tpu.memref_slice %arg2[%14, %c0_i32_22] : memref<40x128xf32, #tpu.memory_space<any>> -> memref<1x128xf32, #tpu.memory_space<any>>
      %c4_i32_23 = arith.constant 4 : i32
      %c0_i32_24 = arith.constant 0 : i32
      %35 = tpu.memref_slice %arg12[%c4_i32_23, %c0_i32_24] : memref<8x128xf32, #tpu.memory_space<vmem>> -> memref<1x128xf32, #tpu.memory_space<vmem>>
      %36 = tpu.memref_slice %arg15[%c4_i32] : memref<8x!tpu.dma_semaphore, #tpu.memory_space<semaphore_mem>> -> memref<1x!tpu.dma_semaphore, #tpu.memory_space<semaphore_mem>>
      %37 = tpu.memref_squeeze %36 : memref<1x!tpu.dma_semaphore, #tpu.memory_space<semaphore_mem>> -> memref<!tpu.dma_semaphore, #tpu.memory_space<semaphore_mem>>
      tpu.enqueue_dma source(%34 : memref<1x128xf32, #tpu.memory_space<any>>) target(%35 : memref<1x128xf32, #tpu.memory_space<vmem>>) target_semaphore(%37 : memref<!tpu.dma_semaphore, #tpu.memory_space<semaphore_mem>>)
      %c5_i32 = arith.constant 5 : i32
      %c0_i32_25 = arith.constant 0 : i32
      %38 = tpu.memref_slice %arg2[%15, %c0_i32_25] : memref<40x128xf32, #tpu.memory_space<any>> -> memref<1x128xf32, #tpu.memory_space<any>>
      %c5_i32_26 = arith.constant 5 : i32
      %c0_i32_27 = arith.constant 0 : i32
      %39 = tpu.memref_slice %arg12[%c5_i32_26, %c0_i32_27] : memref<8x128xf32, #tpu.memory_space<vmem>> -> memref<1x128xf32, #tpu.memory_space<vmem>>
      %40 = tpu.memref_slice %arg15[%c5_i32] : memref<8x!tpu.dma_semaphore, #tpu.memory_space<semaphore_mem>> -> memref<1x!tpu.dma_semaphore, #tpu.memory_space<semaphore_mem>>
      %41 = tpu.memref_squeeze %40 : memref<1x!tpu.dma_semaphore, #tpu.memory_space<semaphore_mem>> -> memref<!tpu.dma_semaphore, #tpu.memory_space<semaphore_mem>>
      tpu.enqueue_dma source(%38 : memref<1x128xf32, #tpu.memory_space<any>>) target(%39 : memref<1x128xf32, #tpu.memory_space<vmem>>) target_semaphore(%41 : memref<!tpu.dma_semaphore, #tpu.memory_space<semaphore_mem>>)
      %c6_i32 = arith.constant 6 : i32
      %c0_i32_28 = arith.constant 0 : i32
      %42 = tpu.memref_slice %arg2[%16, %c0_i32_28] : memref<40x128xf32, #tpu.memory_space<any>> -> memref<1x128xf32, #tpu.memory_space<any>>
      %c6_i32_29 = arith.constant 6 : i32
      %c0_i32_30 = arith.constant 0 : i32
      %43 = tpu.memref_slice %arg12[%c6_i32_29, %c0_i32_30] : memref<8x128xf32, #tpu.memory_space<vmem>> -> memref<1x128xf32, #tpu.memory_space<vmem>>
      %44 = tpu.memref_slice %arg15[%c6_i32] : memref<8x!tpu.dma_semaphore, #tpu.memory_space<semaphore_mem>> -> memref<1x!tpu.dma_semaphore, #tpu.memory_space<semaphore_mem>>
      %45 = tpu.memref_squeeze %44 : memref<1x!tpu.dma_semaphore, #tpu.memory_space<semaphore_mem>> -> memref<!tpu.dma_semaphore, #tpu.memory_space<semaphore_mem>>
      tpu.enqueue_dma source(%42 : memref<1x128xf32, #tpu.memory_space<any>>) target(%43 : memref<1x128xf32, #tpu.memory_space<vmem>>) target_semaphore(%45 : memref<!tpu.dma_semaphore, #tpu.memory_space<semaphore_mem>>)
      %c7_i32 = arith.constant 7 : i32
      %c0_i32_31 = arith.constant 0 : i32
      %46 = tpu.memref_slice %arg2[%17, %c0_i32_31] : memref<40x128xf32, #tpu.memory_space<any>> -> memref<1x128xf32, #tpu.memory_space<any>>
      %c7_i32_32 = arith.constant 7 : i32
      %c0_i32_33 = arith.constant 0 : i32
      %47 = tpu.memref_slice %arg12[%c7_i32_32, %c0_i32_33] : memref<8x128xf32, #tpu.memory_space<vmem>> -> memref<1x128xf32, #tpu.memory_space<vmem>>
      %48 = tpu.memref_slice %arg15[%c7_i32] : memref<8x!tpu.dma_semaphore, #tpu.memory_space<semaphore_mem>> -> memref<1x!tpu.dma_semaphore, #tpu.memory_space<semaphore_mem>>
      %49 = tpu.memref_squeeze %48 : memref<1x!tpu.dma_semaphore, #tpu.memory_space<semaphore_mem>> -> memref<!tpu.dma_semaphore, #tpu.memory_space<semaphore_mem>>
      tpu.enqueue_dma source(%46 : memref<1x128xf32, #tpu.memory_space<any>>) target(%47 : memref<1x128xf32, #tpu.memory_space<vmem>>) target_semaphore(%49 : memref<!tpu.dma_semaphore, #tpu.memory_space<semaphore_mem>>)
      %c0_i32_34 = arith.constant 0 : i32
      %c0_i32_35 = arith.constant 0 : i32
      %50 = tpu.memref_slice %arg2[%10, %c0_i32_35] : memref<40x128xf32, #tpu.memory_space<any>> -> memref<1x128xf32, #tpu.memory_space<any>>
      %c0_i32_36 = arith.constant 0 : i32
      %c0_i32_37 = arith.constant 0 : i32
      %51 = tpu.memref_slice %arg12[%c0_i32_36, %c0_i32_37] : memref<8x128xf32, #tpu.memory_space<vmem>> -> memref<1x128xf32, #tpu.memory_space<vmem>>
      %52 = tpu.memref_slice %arg15[%c0_i32_34] : memref<8x!tpu.dma_semaphore, #tpu.memory_space<semaphore_mem>> -> memref<1x!tpu.dma_semaphore, #tpu.memory_space<semaphore_mem>>
      %53 = tpu.memref_squeeze %52 : memref<1x!tpu.dma_semaphore, #tpu.memory_space<semaphore_mem>> -> memref<!tpu.dma_semaphore, #tpu.memory_space<semaphore_mem>>
      tpu.wait_dma2 semaphore(%53 : memref<!tpu.dma_semaphore, #tpu.memory_space<semaphore_mem>>) src(%50 : memref<1x128xf32, #tpu.memory_space<any>>) dst(%51 : memref<1x128xf32, #tpu.memory_space<vmem>>)
      %c1_i32_38 = arith.constant 1 : i32
      %c0_i32_39 = arith.constant 0 : i32
      %54 = tpu.memref_slice %arg2[%11, %c0_i32_39] : memref<40x128xf32, #tpu.memory_space<any>> -> memref<1x128xf32, #tpu.memory_space<any>>
      %c1_i32_40 = arith.constant 1 : i32
      %c0_i32_41 = arith.constant 0 : i32
      %55 = tpu.memref_slice %arg12[%c1_i32_40, %c0_i32_41] : memref<8x128xf32, #tpu.memory_space<vmem>> -> memref<1x128xf32, #tpu.memory_space<vmem>>
      %56 = tpu.memref_slice %arg15[%c1_i32_38] : memref<8x!tpu.dma_semaphore, #tpu.memory_space<semaphore_mem>> -> memref<1x!tpu.dma_semaphore, #tpu.memory_space<semaphore_mem>>
      %57 = tpu.memref_squeeze %56 : memref<1x!tpu.dma_semaphore, #tpu.memory_space<semaphore_mem>> -> memref<!tpu.dma_semaphore, #tpu.memory_space<semaphore_mem>>
      tpu.wait_dma2 semaphore(%57 : memref<!tpu.dma_semaphore, #tpu.memory_space<semaphore_mem>>) src(%54 : memref<1x128xf32, #tpu.memory_space<any>>) dst(%55 : memref<1x128xf32, #tpu.memory_space<vmem>>)
      %c2_i32_42 = arith.constant 2 : i32
      %c0_i32_43 = arith.constant 0 : i32
      %58 = tpu.memref_slice %arg2[%12, %c0_i32_43] : memref<40x128xf32, #tpu.memory_space<any>> -> memref<1x128xf32, #tpu.memory_space<any>>
      %c2_i32_44 = arith.constant 2 : i32
      %c0_i32_45 = arith.constant 0 : i32
      %59 = tpu.memref_slice %arg12[%c2_i32_44, %c0_i32_45] : memref<8x128xf32, #tpu.memory_space<vmem>> -> memref<1x128xf32, #tpu.memory_space<vmem>>
      %60 = tpu.memref_slice %arg15[%c2_i32_42] : memref<8x!tpu.dma_semaphore, #tpu.memory_space<semaphore_mem>> -> memref<1x!tpu.dma_semaphore, #tpu.memory_space<semaphore_mem>>
      %61 = tpu.memref_squeeze %60 : memref<1x!tpu.dma_semaphore, #tpu.memory_space<semaphore_mem>> -> memref<!tpu.dma_semaphore, #tpu.memory_space<semaphore_mem>>
      tpu.wait_dma2 semaphore(%61 : memref<!tpu.dma_semaphore, #tpu.memory_space<semaphore_mem>>) src(%58 : memref<1x128xf32, #tpu.memory_space<any>>) dst(%59 : memref<1x128xf32, #tpu.memory_space<vmem>>)
      %c3_i32_46 = arith.constant 3 : i32
      %c0_i32_47 = arith.constant 0 : i32
      %62 = tpu.memref_slice %arg2[%13, %c0_i32_47] : memref<40x128xf32, #tpu.memory_space<any>> -> memref<1x128xf32, #tpu.memory_space<any>>
      %c3_i32_48 = arith.constant 3 : i32
      %c0_i32_49 = arith.constant 0 : i32
      %63 = tpu.memref_slice %arg12[%c3_i32_48, %c0_i32_49] : memref<8x128xf32, #tpu.memory_space<vmem>> -> memref<1x128xf32, #tpu.memory_space<vmem>>
      %64 = tpu.memref_slice %arg15[%c3_i32_46] : memref<8x!tpu.dma_semaphore, #tpu.memory_space<semaphore_mem>> -> memref<1x!tpu.dma_semaphore, #tpu.memory_space<semaphore_mem>>
      %65 = tpu.memref_squeeze %64 : memref<1x!tpu.dma_semaphore, #tpu.memory_space<semaphore_mem>> -> memref<!tpu.dma_semaphore, #tpu.memory_space<semaphore_mem>>
      tpu.wait_dma2 semaphore(%65 : memref<!tpu.dma_semaphore, #tpu.memory_space<semaphore_mem>>) src(%62 : memref<1x128xf32, #tpu.memory_space<any>>) dst(%63 : memref<1x128xf32, #tpu.memory_space<vmem>>)
      %c4_i32_50 = arith.constant 4 : i32
      %c0_i32_51 = arith.constant 0 : i32
      %66 = tpu.memref_slice %arg2[%14, %c0_i32_51] : memref<40x128xf32, #tpu.memory_space<any>> -> memref<1x128xf32, #tpu.memory_space<any>>
      %c4_i32_52 = arith.constant 4 : i32
      %c0_i32_53 = arith.constant 0 : i32
      %67 = tpu.memref_slice %arg12[%c4_i32_52, %c0_i32_53] : memref<8x128xf32, #tpu.memory_space<vmem>> -> memref<1x128xf32, #tpu.memory_space<vmem>>
      %68 = tpu.memref_slice %arg15[%c4_i32_50] : memref<8x!tpu.dma_semaphore, #tpu.memory_space<semaphore_mem>> -> memref<1x!tpu.dma_semaphore, #tpu.memory_space<semaphore_mem>>
      %69 = tpu.memref_squeeze %68 : memref<1x!tpu.dma_semaphore, #tpu.memory_space<semaphore_mem>> -> memref<!tpu.dma_semaphore, #tpu.memory_space<semaphore_mem>>
      tpu.wait_dma2 semaphore(%69 : memref<!tpu.dma_semaphore, #tpu.memory_space<semaphore_mem>>) src(%66 : memref<1x128xf32, #tpu.memory_space<any>>) dst(%67 : memref<1x128xf32, #tpu.memory_space<vmem>>)
      %c5_i32_54 = arith.constant 5 : i32
      %c0_i32_55 = arith.constant 0 : i32
      %70 = tpu.memref_slice %arg2[%15, %c0_i32_55] : memref<40x128xf32, #tpu.memory_space<any>> -> memref<1x128xf32, #tpu.memory_space<any>>
      %c5_i32_56 = arith.constant 5 : i32
      %c0_i32_57 = arith.constant 0 : i32
      %71 = tpu.memref_slice %arg12[%c5_i32_56, %c0_i32_57] : memref<8x128xf32, #tpu.memory_space<vmem>> -> memref<1x128xf32, #tpu.memory_space<vmem>>
      %72 = tpu.memref_slice %arg15[%c5_i32_54] : memref<8x!tpu.dma_semaphore, #tpu.memory_space<semaphore_mem>> -> memref<1x!tpu.dma_semaphore, #tpu.memory_space<semaphore_mem>>
      %73 = tpu.memref_squeeze %72 : memref<1x!tpu.dma_semaphore, #tpu.memory_space<semaphore_mem>> -> memref<!tpu.dma_semaphore, #tpu.memory_space<semaphore_mem>>
      tpu.wait_dma2 semaphore(%73 : memref<!tpu.dma_semaphore, #tpu.memory_space<semaphore_mem>>) src(%70 : memref<1x128xf32, #tpu.memory_space<any>>) dst(%71 : memref<1x128xf32, #tpu.memory_space<vmem>>)
      %c6_i32_58 = arith.constant 6 : i32
      %c0_i32_59 = arith.constant 0 : i32
      %74 = tpu.memref_slice %arg2[%16, %c0_i32_59] : memref<40x128xf32, #tpu.memory_space<any>> -> memref<1x128xf32, #tpu.memory_space<any>>
      %c6_i32_60 = arith.constant 6 : i32
      %c0_i32_61 = arith.constant 0 : i32
      %75 = tpu.memref_slice %arg12[%c6_i32_60, %c0_i32_61] : memref<8x128xf32, #tpu.memory_space<vmem>> -> memref<1x128xf32, #tpu.memory_space<vmem>>
      %76 = tpu.memref_slice %arg15[%c6_i32_58] : memref<8x!tpu.dma_semaphore, #tpu.memory_space<semaphore_mem>> -> memref<1x!tpu.dma_semaphore, #tpu.memory_space<semaphore_mem>>
      %77 = tpu.memref_squeeze %76 : memref<1x!tpu.dma_semaphore, #tpu.memory_space<semaphore_mem>> -> memref<!tpu.dma_semaphore, #tpu.memory_space<semaphore_mem>>
      tpu.wait_dma2 semaphore(%77 : memref<!tpu.dma_semaphore, #tpu.memory_space<semaphore_mem>>) src(%74 : memref<1x128xf32, #tpu.memory_space<any>>) dst(%75 : memref<1x128xf32, #tpu.memory_space<vmem>>)
      %c7_i32_62 = arith.constant 7 : i32
      %c0_i32_63 = arith.constant 0 : i32
      %78 = tpu.memref_slice %arg2[%17, %c0_i32_63] : memref<40x128xf32, #tpu.memory_space<any>> -> memref<1x128xf32, #tpu.memory_space<any>>
      %c7_i32_64 = arith.constant 7 : i32
      %c0_i32_65 = arith.constant 0 : i32
      %79 = tpu.memref_slice %arg12[%c7_i32_64, %c0_i32_65] : memref<8x128xf32, #tpu.memory_space<vmem>> -> memref<1x128xf32, #tpu.memory_space<vmem>>
      %80 = tpu.memref_slice %arg15[%c7_i32_62] : memref<8x!tpu.dma_semaphore, #tpu.memory_space<semaphore_mem>> -> memref<1x!tpu.dma_semaphore, #tpu.memory_space<semaphore_mem>>
      %81 = tpu.memref_squeeze %80 : memref<1x!tpu.dma_semaphore, #tpu.memory_space<semaphore_mem>> -> memref<!tpu.dma_semaphore, #tpu.memory_space<semaphore_mem>>
      tpu.wait_dma2 semaphore(%81 : memref<!tpu.dma_semaphore, #tpu.memory_space<semaphore_mem>>) src(%78 : memref<1x128xf32, #tpu.memory_space<any>>) dst(%79 : memref<1x128xf32, #tpu.memory_space<vmem>>)
      %c0_66 = arith.constant 0 : index
      %c0_67 = arith.constant 0 : index
      %82 = vector.load %arg12[%c0_66, %c0_67] : memref<8x128xf32, #tpu.memory_space<vmem>>, vector<8x16xf32>
      %83 = arith.truncf %82 : vector<8x16xf32> to vector<8x16xbf16>
      %c0_68 = arith.constant 0 : index
      %c0_69 = arith.constant 0 : index
      %84 = vector.load %arg13[%c0_68, %c0_69] : memref<8x128xbf16, #tpu.memory_space<vmem>>, vector<8x16xbf16>
      tpu.vector_store %arg13[%c0_68, %c0_69], %83 {strides = array<i32>} : memref<8x128xbf16, #tpu.memory_space<vmem>>, vector<8x16xbf16>,
      %c0_70 = arith.constant 0 : index
      %c0_71 = arith.constant 0 : index
      %85 = vector.load %arg3[%c0_70, %c0_71] : memref<8x128xf32, #tpu.memory_space<vmem>>, vector<8x112xf32>
      %86 = arith.truncf %85 : vector<8x112xf32> to vector<8x112xbf16>
      %c0_72 = arith.constant 0 : index
      %c16 = arith.constant 16 : index
      %87 = vector.load %arg13[%c0_72, %c16] : memref<8x128xbf16, #tpu.memory_space<vmem>>, vector<8x112xbf16>
      tpu.vector_store %arg13[%c0_72, %c16], %86 {strides = array<i32>} : memref<8x128xbf16, #tpu.memory_space<vmem>>, vector<8x112xbf16>,
      %c0_73 = arith.constant 0 : index
      %c0_74 = arith.constant 0 : index
      %88 = vector.load %arg13[%c0_73, %c0_74] : memref<8x128xbf16, #tpu.memory_space<vmem>>, vector<8x128xbf16>
      %c0_75 = arith.constant 0 : index
      %c0_76 = arith.constant 0 : index
      %89 = vector.load %arg5[%c0_75, %c0_76] : memref<128x512xbf16, #tpu.memory_space<vmem>>, vector<128x512xbf16>
      %cst_77 = arith.constant dense<0.000000e+00> : vector<8x512xf32>
      %90 = tpu.matmul %88, %89, %cst_77 {dimension_numbers = #tpu.dot_dimension_numbers<[1], [0], [0], [1], [0, 0, 1, 1], [], []>} : vector<8x128xbf16>, vector<128x512xbf16>, vector<8x512xf32> -> vector<8x512xf32>
      %c0_78 = arith.constant 0 : index
      %c0_79 = arith.constant 0 : index
      %91 = vector.load %arg6[%c0_78, %c0_79] : memref<1x512xf32, #tpu.memory_space<vmem>>, vector<1x512xf32>
      %92 = vector.broadcast %91 : vector<1x512xf32> to vector<8x512xf32>
      %93 = arith.addf %90, %92 : vector<8x512xf32>
      %94 = vector.extract_strided_slice %93 {offsets = [0, 0], sizes = [8, 128], strides = [1, 1]} : vector<8x512xf32> to vector<8x128xf32>
      %95 = arith.negf %94 : vector<8x128xf32>
      %96 = math.exp %95 : vector<8x128xf32>
      %cst_80 = arith.constant 1.000000e+00 : f32
      %97 = vector.broadcast %cst_80 : f32 to vector<8x128xf32>
      %98 = arith.addf %97, %96 : vector<8x128xf32>
      %99 = arith.divf %97, %98 : vector<8x128xf32>
      %100 = vector.extract_strided_slice %93 {offsets = [0, 128], sizes = [8, 128], strides = [1, 1]} : vector<8x512xf32> to vector<8x128xf32>
      %101 = arith.negf %100 : vector<8x128xf32>
      %102 = math.exp %101 : vector<8x128xf32>
      %cst_81 = arith.constant 1.000000e+00 : f32
      %103 = vector.broadcast %cst_81 : f32 to vector<8x128xf32>
      %104 = arith.addf %103, %102 : vector<8x128xf32>
      %105 = arith.divf %103, %104 : vector<8x128xf32>
      %106 = vector.extract_strided_slice %93 {offsets = [0, 256], sizes = [8, 128], strides = [1, 1]} : vector<8x512xf32> to vector<8x128xf32>
      %107 = math.tanh %106 : vector<8x128xf32>
      %108 = vector.extract_strided_slice %93 {offsets = [0, 384], sizes = [8, 128], strides = [1, 1]} : vector<8x512xf32> to vector<8x128xf32>
      %109 = arith.negf %108 : vector<8x128xf32>
      %110 = math.exp %109 : vector<8x128xf32>
      %cst_82 = arith.constant 1.000000e+00 : f32
      %111 = vector.broadcast %cst_82 : f32 to vector<8x128xf32>
      %112 = arith.addf %111, %110 : vector<8x128xf32>
      %113 = arith.divf %111, %112 : vector<8x128xf32>
      %c0_83 = arith.constant 0 : index
      %c0_84 = arith.constant 0 : index
      %114 = vector.load %arg4[%c0_83, %c0_84] : memref<8x128xf32, #tpu.memory_space<vmem>>, vector<8x128xf32>
      %115 = arith.mulf %105, %114 : vector<8x128xf32>
      %116 = arith.mulf %99, %107 : vector<8x128xf32>
      %117 = arith.addf %115, %116 : vector<8x128xf32>
      %118 = math.tanh %117 : vector<8x128xf32>
      %119 = arith.mulf %113, %118 : vector<8x128xf32>
      %c0_85 = arith.constant 0 : index
      %c0_86 = arith.constant 0 : index
      %120 = vector.load %arg11[%c0_85, %c0_86] : memref<8x128xf32, #tpu.memory_space<vmem>>, vector<8x128xf32>
      tpu.vector_store %arg11[%c0_85, %c0_86], %117 {strides = array<i32>} : memref<8x128xf32, #tpu.memory_space<vmem>>, vector<8x128xf32>,
      %c0_87 = arith.constant 0 : index
      %c0_88 = arith.constant 0 : index
      %121 = vector.load %arg10[%c0_87, %c0_88] : memref<8x128xf32, #tpu.memory_space<vmem>>, vector<8x128xf32>
      tpu.vector_store %arg10[%c0_87, %c0_88], %119 {strides = array<i32>} : memref<8x128xf32, #tpu.memory_space<vmem>>, vector<8x128xf32>,
      %122 = arith.truncf %119 : vector<8x128xf32> to vector<8x128xbf16>
      %c0_89 = arith.constant 0 : index
      %c0_90 = arith.constant 0 : index
      %123 = vector.load %arg14[%c0_89, %c0_90] : memref<8x128xbf16, #tpu.memory_space<vmem>>, vector<8x128xbf16>
      tpu.vector_store %arg14[%c0_89, %c0_90], %122 {strides = array<i32>} : memref<8x128xbf16, #tpu.memory_space<vmem>>, vector<8x128xbf16>,
    } else {
    }
    %c0 = arith.constant 0 : index
    %c0_1 = arith.constant 0 : index
    %3 = vector.load %arg14[%c0, %c0_1] : memref<8x128xbf16, #tpu.memory_space<vmem>>, vector<8x128xbf16>
    %c0_2 = arith.constant 0 : index
    %c0_3 = arith.constant 0 : index
    %4 = vector.load %arg7[%c0_2, %c0_3] : memref<128x128xbf16, #tpu.memory_space<vmem>>, vector<128x128xbf16>
    %cst = arith.constant dense<0.000000e+00> : vector<8x128xf32>
    %5 = tpu.matmul %3, %4, %cst {dimension_numbers = #tpu.dot_dimension_numbers<[1], [0], [0], [1], [0, 0, 1, 1], [], []>} : vector<8x128xbf16>, vector<128x128xbf16>, vector<8x128xf32> -> vector<8x128xf32>
    %c0_4 = arith.constant 0 : index
    %c0_5 = arith.constant 0 : index
    %6 = vector.load %arg8[%c0_4, %c0_5] : memref<1x128xf32, #tpu.memory_space<vmem>>, vector<1x128xf32>
    %7 = vector.broadcast %6 : vector<1x128xf32> to vector<8x128xf32>
    %8 = arith.addf %5, %7 : vector<8x128xf32>
    %c0_6 = arith.constant 0 : index
    %c0_7 = arith.constant 0 : index
    %9 = vector.load %arg9[%c0_6, %c0_7] : memref<8x128xf32, #tpu.memory_space<vmem>>, vector<8x128xf32>
    tpu.vector_store %arg9[%c0_6, %c0_7], %8 {strides = array<i32>} : memref<8x128xf32, #tpu.memory_space<vmem>>, vector<8x128xf32>,
    return
  }
  func.func @transform_1(%arg0: i32, %arg1: memref<8xi32, #tpu.memory_space<smem>>) -> (i32, i32) {
    %c0_i32 = arith.constant 0 : i32
    %c0_i32_0 = arith.constant 0 : i32
    %c0_i32_1 = arith.constant 0 : i32
    return %c0_i32, %c0_i32_0 : i32, i32
  }
  func.func @transform_2(%arg0: i32, %arg1: memref<8xi32, #tpu.memory_space<smem>>) -> (i32, i32) {
    %c0_i32 = arith.constant 0 : i32
    %c0_i32_0 = arith.constant 0 : i32
    %c0_i32_1 = arith.constant 0 : i32
    return %c0_i32, %c0_i32_0 : i32, i32
  }
  func.func @transform_3(%arg0: i32, %arg1: memref<8xi32, #tpu.memory_space<smem>>) -> (i32, i32) {
    %c0_i32 = arith.constant 0 : i32
    %c0_i32_0 = arith.constant 0 : i32
    %c0_i32_1 = arith.constant 0 : i32
    return %c0_i32, %c0_i32_0 : i32, i32
  }
  func.func @transform_4(%arg0: i32, %arg1: memref<8xi32, #tpu.memory_space<smem>>) -> (i32, i32) {
    %c0_i32 = arith.constant 0 : i32
    %c0_i32_0 = arith.constant 0 : i32
    %c0_i32_1 = arith.constant 0 : i32
    return %c0_i32, %c0_i32_0 : i32, i32
  }
  func.func @transform_5(%arg0: i32, %arg1: memref<8xi32, #tpu.memory_space<smem>>) -> (i32, i32) {
    %c0_i32 = arith.constant 0 : i32
    %c0_i32_0 = arith.constant 0 : i32
    return %c0_i32, %arg0 : i32, i32
  }
  func.func @transform_6(%arg0: i32, %arg1: memref<8xi32, #tpu.memory_space<smem>>) -> (i32, i32) {
    %c0_i32 = arith.constant 0 : i32
    %c0_i32_0 = arith.constant 0 : i32
    return %c0_i32, %arg0 : i32, i32
  }
  func.func @transform_7(%arg0: i32, %arg1: memref<8xi32, #tpu.memory_space<smem>>) -> (i32, i32) {
    %c0_i32 = arith.constant 0 : i32
    %c0_i32_0 = arith.constant 0 : i32
    return %c0_i32, %arg0 : i32, i32
  }
  func.func @transform_8(%arg0: i32, %arg1: memref<8xi32, #tpu.memory_space<smem>>) -> (i32, i32) {
    %c0_i32 = arith.constant 0 : i32
    %c0_i32_0 = arith.constant 0 : i32
    %c0_i32_1 = arith.constant 0 : i32
    return %c0_i32, %c0_i32_0 : i32, i32
  }
  func.func @transform_9(%arg0: i32, %arg1: memref<8xi32, #tpu.memory_space<smem>>) -> (i32, i32) {
    %c0_i32 = arith.constant 0 : i32
    %c0_i32_0 = arith.constant 0 : i32
    %c0_i32_1 = arith.constant 0 : i32
    return %c0_i32, %c0_i32_0 : i32, i32
  }
}

</mosaic_0001>

<llo_original>
// kernel: decoder_forward.1
$region0: #{decoder_forward.1}
  #allocation0 [shape = 'u32[]', space=smem, size = 0x4, offset = 0x4, fixed_abs, tag = 'smem constant byte address 0x4 - core index']
  #allocation1 [shape = 'u32[72,128]{1,0:T(1,128)}', space=vmem, size = 0x9000, scoped, tag = 'internal scratch']
  #allocation2 [shape = 'f32[8,128]{1,0:T(8,128)}', space=vmem, size = 0x1000, scoped, tag = 'scratch operand']
  #allocation3 [shape = 'bf16[8,128]{1,0:T(8,128)(2,1)}', space=vmem, size = 0x800, scoped, tag = 'scratch operand']
  #allocation4 [shape = 'bf16[8,128]{1,0:T(8,128)(2,1)}', space=vmem, size = 0x800, scoped, tag = 'scratch operand']
  #allocation5 [shape = 's32[8]{0}', space=sflag, size = 0x20, scoped, tag = 'scratch operand']
  #allocation6 [shape = 's32[1]{0}', space=sflag, size = 0x4, scoped, tag = 'scoped memory for decoder_forward.1']
  #allocation7 [shape = 'u8[512]{0}', space=smem, size = 0x200, scoped, tag = 'prefetched SMEM operand 0']
  #allocation14 [shape = 's32[]', space=sflag, size = 0x4, offset = 0, fixed_abs, tag = 'sflag constant byte address 0x0 - dummy sync flag']
  #allocation15 [shape = 's32[]', space=sflag, size = 0x4, offset = 0, fixed_abs, tag = 'sflag constant byte address 0x0 - dummy sync flag']
  #allocation16 [shape = 's32[]', space=sflag, size = 0x4, offset = 0, fixed_abs, tag = 'sflag constant byte address 0x0 - dummy sync flag']
  #allocation17 [shape = 's32[]', space=sflag, size = 0x4, offset = 0, fixed_abs, tag = 'sflag constant byte address 0x0 - dummy sync flag']
  #allocation18 [shape = 's32[]', space=sflag, size = 0x4, offset = 0, fixed_abs, tag = 'sflag constant byte address 0x0 - dummy sync flag']
  #allocation19 [shape = 's32[]', space=sflag, size = 0x4, offset = 0, fixed_abs, tag = 'sflag constant byte address 0x0 - dummy sync flag']
  #allocation20 [shape = 's32[]', space=sflag, size = 0x4, offset = 0, fixed_abs, tag = 'sflag constant byte address 0x0 - dummy sync flag']
  #allocation21 [shape = 's32[]', space=sflag, size = 0x4, offset = 0, fixed_abs, tag = 'sflag constant byte address 0x0 - dummy sync flag']
  %s0 = inlined_call_operand.vmem [shape: s32[8], index: 0, kind: input, shape index: {}]
  %s1 = inlined_call_operand.vmem [shape: f32[40,128], index: 1, kind: input, shape index: {}]
  %s2 = inlined_call_operand.vmem [shape: f32[8,128], index: 2, kind: input, shape index: {}]
  %s3 = inlined_call_operand.vmem [shape: f32[8,128], index: 3, kind: input, shape index: {}]
  %s4 = inlined_call_operand.hbm [shape: bf16[128,512], index: 4, kind: input, shape index: {}]
  %s5 = inlined_call_operand.vmem [shape: f32[1,512], index: 5, kind: input, shape index: {}]
  %s6 = inlined_call_operand.hbm [shape: bf16[128,128], index: 6, kind: input, shape index: {}]
  %s7 = inlined_call_operand.vmem [shape: f32[1,128], index: 7, kind: input, shape index: {}]
  %s8 = inlined_call_operand.hbm [shape: f32[8,128], index: 8, kind: output, shape index: {0}]
  %s9 = inlined_call_operand.vmem [shape: f32[8,128], index: 9, kind: output, shape index: {1}]
  %s10 = inlined_call_operand.vmem [shape: f32[8,128], index: 10, kind: output, shape index: {2}]
  %11 = xla_tuple %s8, %s9, %s10
  %s12 = sld [smem:[#allocation0]]
  $region302: #{decoder_forward.1} parent=0
    _
  %s14 = ssub.s32 1, %s12
  %s15 = scalar_select 0, %s14, %s12
  %s17 = sshll.u32 %s0, 4
  %s18 = int_to_ptr.vmem [resolvable:$true] %s17
  %20 = dma.vmem_to_smem %s18, 16, [#allocation7], [#allocation6]
  %22 = dma.done [#allocation6], 16
  %23 = sfence
  $region1: #{decoder_forward.1} parent=0
    #allocation8 [shape = 'u8[131072]{0}', space=vmem, size = 0x20000, scoped, tag = 'input window, operand 4, single buffered']
    #allocation9 [shape = 's32[1]{0}', space=sflag, size = 0x4, scoped, tag = 'scoped memory for decoder_forward.1']
    #allocation10 [shape = 's32[1]{0}', space=sflag, size = 0x4, scoped, tag = 'scoped memory for decoder_forward.1']
    #allocation11 [shape = 'u8[32768]{0}', space=vmem, size = 0x8000, scoped, tag = 'input window, operand 6, single buffered']
    #allocation12 [shape = 's32[1]{0}', space=sflag, size = 0x4, scoped, tag = 'scoped memory for decoder_forward.1']
    #allocation13 [shape = 'u8[4096]{0}', space=vmem, size = 0x1000, scoped, tag = 'output window, operand 0, single buffered']
    %24 = vsyncpa [#allocation9], 0
    %25 = vsyncpa [#allocation12], 0
    %26 = vsyncpa [#allocation10], 0
    // Predicated region
    $region2: #{decoder_forward.1} parent=1 // pred_check
      _
    $region3: #{decoder_forward.1} parent=1 // pred_check_branch
      %28 = sbr.rel (0) target = $region5
    $region4: #{decoder_forward.1} parent=1 // pred_region
      _
    $region5: #{decoder_forward.1} parent=1 // pred_fallthru
      _
    // Predicated region
    $region6: #{decoder_forward.1} parent=1 // pred_check
      _
    $region7: #{decoder_forward.1} parent=1 // pred_check_branch
      %30 = sbr.rel (0) target = $region9
    $region8: #{decoder_forward.1} parent=1 // pred_region
      _
    $region9: #{decoder_forward.1} parent=1 // pred_fallthru
      _
    // Predicated region
    $region10: #{decoder_forward.1} parent=1 // pred_check
      _
    $region11: #{decoder_forward.1} parent=1 // pred_check_branch
      %32 = sbr.rel (0) target = $region13
    $region12: #{decoder_forward.1} parent=1 // pred_region
      %34 = vsyncadd [#allocation9], 0
      %s35 = sshll.u32 %s4, 4
      %s36 = int_to_ptr.hbm [resolvable:$true] %s35
      %s37 = sshll.u32 [#allocation8], 4
      %s38 = int_to_ptr.vmem [resolvable:$true] %s37
      %43 = dma.hbm_to_vmem [thread:$0]  %s36, 4096, %s38, [#allocation9], 256, 256, 16
    $region13: #{decoder_forward.1} parent=1 // pred_fallthru
      _
    // Predicated region
    $region14: #{decoder_forward.1} parent=1 // pred_check
      _
    $region15: #{decoder_forward.1} parent=1 // pred_check_branch
      %45 = sbr.rel (0) target = $region17
    $region16: #{decoder_forward.1} parent=1 // pred_region
      _
    $region17: #{decoder_forward.1} parent=1 // pred_fallthru
      _
    // Predicated region
    $region18: #{decoder_forward.1} parent=1 // pred_check
      _
    $region19: #{decoder_forward.1} parent=1 // pred_check_branch
      %47 = sbr.rel (0) target = $region21
    $region20: #{decoder_forward.1} parent=1 // pred_region
      %49 = vsyncadd [#allocation12], 0
      %s50 = sshll.u32 %s6, 4
      %s51 = int_to_ptr.hbm [resolvable:$true] %s50
      %s52 = sshll.u32 [#allocation11], 4
      %s53 = int_to_ptr.vmem [resolvable:$true] %s52
      %58 = dma.hbm_to_vmem [thread:$0]  %s51, 1024, %s53, [#allocation12], 64, 64, 4
    $region21: #{decoder_forward.1} parent=1 // pred_fallthru
      _
    // Predicated region
    $region22: #{decoder_forward.1} parent=1 // pred_check
      _
    $region23: #{decoder_forward.1} parent=1 // pred_check_branch
      %60 = sbr.rel (0) target = $region25
    $region24: #{decoder_forward.1} parent=1 // pred_region
      _
    $region25: #{decoder_forward.1} parent=1 // pred_fallthru
      _
    // Predicated region
    $region26: #{decoder_forward.1} parent=1 // pred_check
      _
    $region27: #{decoder_forward.1} parent=1 // pred_check_branch
      %62 = sbr.rel (0) target = $region29
    $region28: #{decoder_forward.1} parent=1 // pred_region
      %64 = dma.done [#allocation9], 4096
    $region29: #{decoder_forward.1} parent=1 // pred_fallthru
      _
    // Predicated region
    $region30: #{decoder_forward.1} parent=1 // pred_check
      _
    $region31: #{decoder_forward.1} parent=1 // pred_check_branch
      %66 = sbr.rel (0) target = $region33
    $region32: #{decoder_forward.1} parent=1 // pred_region
      %68 = dma.done [#allocation12], 1024
    $region33: #{decoder_forward.1} parent=1 // pred_fallthru
      _
    %p69 = scmp.eq.s32.totalorder 0, 0
    // Predicated region
    $region34: #{decoder_forward.1} parent=1 // pred_check
      %p70 = pneg %p69
    $region35: #{decoder_forward.1} parent=1 // pred_check_branch
      %72 = sbr.rel (%p70) target = $region37
    $region36: #{decoder_forward.1} parent=1 // pred_region
      %s73 = sld [smem:[#allocation7]]
      %s74 = sld [smem:[#allocation7 + $0x1]]
      %s75 = sld [smem:[#allocation7 + $0x2]]
      %s76 = sld [smem:[#allocation7 + $0x3]]
      %s77 = sld [smem:[#allocation7 + $0x4]]
      %s78 = sld [smem:[#allocation7 + $0x5]]
      %s79 = sld [smem:[#allocation7 + $0x6]]
      %s80 = sld [smem:[#allocation7 + $0x7]]
      %s81 = scalar_lea.vmem %s1, %s73
      // Predicated region
      $region38: #{decoder_forward.1} parent=36 // pred_check
        _
      $region39: #{decoder_forward.1} parent=36 // pred_check_branch
        %83 = sbr.rel target = $region41
      $region40: #{decoder_forward.1} parent=36 // pred_region
        // Predicated region
        $region53: #{decoder_forward.1} parent=40 // pred_check
          _
        $region54: #{decoder_forward.1} parent=40 // pred_check_branch
          %99 = sbr.rel (0) target = $region56
        $region55: #{decoder_forward.1} parent=40 // pred_region
          %s101 = ssub.s32 2, 1
          loop: start=0, step=1, limit=1
          $region57: #{decoder_forward.1} parent=55 // loop_pre_header
            _
          $region58: #{decoder_forward.1} parent=55 // loop_header
            %s103 = sphi 0, %s107
            %p104 = scmp.ge.s32.totalorder %s103, 1
            %s108 = sphi %s81, %s81
            %s109 = sphi [#allocation2], [#allocation2]
          $region59: #{decoder_forward.1} parent=55 // loop_header_branch
            %106 = sbr.rel (%p104) target = $region63
          $region60: #{decoder_forward.1} parent=55 // loop_body
            %v110 = vld [vmem:[%s108] sm:%s101]
            %111 = vst [vmem:[%s109] sm:%s101] %v110
          $region61: #{decoder_forward.1} parent=55 // loop_footer
            %s107 = sadd.s32 1, %s103
          $region62: #{decoder_forward.1} parent=55 // loop_footer_branch
            %102 = sbr.rel target = $region58
          $region63: #{decoder_forward.1} parent=55 // loop_exit
            _
        $region56: #{decoder_forward.1} parent=40 // pred_fallthru
          _
      $region41: #{decoder_forward.1} parent=36 // pred_fallthru
        _
      // Predicated region
      $region42: #{decoder_forward.1} parent=36 // pred_check
        _
      $region43: #{decoder_forward.1} parent=36 // pred_check_branch
        %85 = sbr.rel (0) target = $region45
      $region44: #{decoder_forward.1} parent=36 // pred_region
        %s87 = ssub.s32 2, 1
        loop: start=0, step=1, limit=1
        $region46: #{decoder_forward.1} parent=44 // loop_pre_header
          _
        $region47: #{decoder_forward.1} parent=44 // loop_header
          %s89 = sphi 0, %s93
          %p90 = scmp.ge.s32.totalorder %s89, 1
          %s94 = sphi %s81, %s81
          %s95 = sphi [#allocation2], [#allocation2]
        $region48: #{decoder_forward.1} parent=44 // loop_header_branch
          %92 = sbr.rel (%p90) target = $region52
        $region49: #{decoder_forward.1} parent=44 // loop_body
          %v96 = vld [vmem:[%s94] sm:%s87]
          %97 = vst [vmem:[%s95] sm:%s87] %v96
        $region50: #{decoder_forward.1} parent=44 // loop_footer
          %s93 = sadd.s32 1, %s89
        $region51: #{decoder_forward.1} parent=44 // loop_footer_branch
          %88 = sbr.rel target = $region47
        $region52: #{decoder_forward.1} parent=44 // loop_exit
          _
      $region45: #{decoder_forward.1} parent=36 // pred_fallthru
        _
      // Predicated region
      $region64: #{decoder_forward.1} parent=36 // pred_check
        _
      $region65: #{decoder_forward.1} parent=36 // pred_check_branch
        %114 = sbr.rel (0) target = $region67
      $region66: #{decoder_forward.1} parent=36 // pred_region
        %115 = vsyncadd [#allocation5], 16
      $region67: #{decoder_forward.1} parent=36 // pred_fallthru
        _
      %s116 = scalar_lea.vmem %s1, %s74
      %s117 = scalar_lea.vmem [#allocation2], 1
      %s118 = scalar_lea.sflag [#allocation5], 1
      // Predicated region
      $region68: #{decoder_forward.1} parent=36 // pred_check
        _
      $region69: #{decoder_forward.1} parent=36 // pred_check_branch
        %120 = sbr.rel target = $region71
      $region70: #{decoder_forward.1} parent=36 // pred_region
        // Predicated region
        $region83: #{decoder_forward.1} parent=70 // pred_check
          _
        $region84: #{decoder_forward.1} parent=70 // pred_check_branch
          %136 = sbr.rel (0) target = $region86
        $region85: #{decoder_forward.1} parent=70 // pred_region
          %s138 = ssub.s32 2, 1
          loop: start=0, step=1, limit=1
          $region87: #{decoder_forward.1} parent=85 // loop_pre_header
            _
          $region88: #{decoder_forward.1} parent=85 // loop_header
            %s140 = sphi 0, %s144
            %p141 = scmp.ge.s32.totalorder %s140, 1
            %s145 = sphi %s116, %s116
            %s146 = sphi %s117, %s117
          $region89: #{decoder_forward.1} parent=85 // loop_header_branch
            %143 = sbr.rel (%p141) target = $region93
          $region90: #{decoder_forward.1} parent=85 // loop_body
            %v147 = vld [vmem:[%s145] sm:%s138]
            %148 = vst [vmem:[%s146] sm:%s138] %v147
          $region91: #{decoder_forward.1} parent=85 // loop_footer
            %s144 = sadd.s32 1, %s140
          $region92: #{decoder_forward.1} parent=85 // loop_footer_branch
            %139 = sbr.rel target = $region88
          $region93: #{decoder_forward.1} parent=85 // loop_exit
            _
        $region86: #{decoder_forward.1} parent=70 // pred_fallthru
          _
      $region71: #{decoder_forward.1} parent=36 // pred_fallthru
        _
      // Predicated region
      $region72: #{decoder_forward.1} parent=36 // pred_check
        _
      $region73: #{decoder_forward.1} parent=36 // pred_check_branch
        %122 = sbr.rel (0) target = $region75
      $region74: #{decoder_forward.1} parent=36 // pred_region
        %s124 = ssub.s32 2, 1
        loop: start=0, step=1, limit=1
        $region76: #{decoder_forward.1} parent=74 // loop_pre_header
          _
        $region77: #{decoder_forward.1} parent=74 // loop_header
          %s126 = sphi 0, %s130
          %p127 = scmp.ge.s32.totalorder %s126, 1
          %s131 = sphi %s116, %s116
          %s132 = sphi %s117, %s117
        $region78: #{decoder_forward.1} parent=74 // loop_header_branch
          %129 = sbr.rel (%p127) target = $region82
        $region79: #{decoder_forward.1} parent=74 // loop_body
          %v133 = vld [vmem:[%s131] sm:%s124]
          %134 = vst [vmem:[%s132] sm:%s124] %v133
        $region80: #{decoder_forward.1} parent=74 // loop_footer
          %s130 = sadd.s32 1, %s126
        $region81: #{decoder_forward.1} parent=74 // loop_footer_branch
          %125 = sbr.rel target = $region77
        $region82: #{decoder_forward.1} parent=74 // loop_exit
          _
      $region75: #{decoder_forward.1} parent=36 // pred_fallthru
        _
      // Predicated region
      $region94: #{decoder_forward.1} parent=36 // pred_check
        _
      $region95: #{decoder_forward.1} parent=36 // pred_check_branch
        %151 = sbr.rel (0) target = $region97
      $region96: #{decoder_forward.1} parent=36 // pred_region
        %152 = vsyncadd %s118, 16
      $region97: #{decoder_forward.1} parent=36 // pred_fallthru
        _
      %s153 = scalar_lea.vmem %s1, %s75
      %s154 = scalar_lea.vmem [#allocation2], 2
      %s155 = scalar_lea.sflag [#allocation5], 2
      // Predicated region
      $region98: #{decoder_forward.1} parent=36 // pred_check
        _
      $region99: #{decoder_forward.1} parent=36 // pred_check_branch
        %157 = sbr.rel target = $region101
      $region100: #{decoder_forward.1} parent=36 // pred_region
        // Predicated region
        $region113: #{decoder_forward.1} parent=100 // pred_check
          _
        $region114: #{decoder_forward.1} parent=100 // pred_check_branch
          %173 = sbr.rel (0) target = $region116
        $region115: #{decoder_forward.1} parent=100 // pred_region
          %s175 = ssub.s32 2, 1
          loop: start=0, step=1, limit=1
          $region117: #{decoder_forward.1} parent=115 // loop_pre_header
            _
          $region118: #{decoder_forward.1} parent=115 // loop_header
            %s177 = sphi 0, %s181
            %p178 = scmp.ge.s32.totalorder %s177, 1
            %s182 = sphi %s153, %s153
            %s183 = sphi %s154, %s154
          $region119: #{decoder_forward.1} parent=115 // loop_header_branch
            %180 = sbr.rel (%p178) target = $region123
          $region120: #{decoder_forward.1} parent=115 // loop_body
            %v184 = vld [vmem:[%s182] sm:%s175]
            %185 = vst [vmem:[%s183] sm:%s175] %v184
          $region121: #{decoder_forward.1} parent=115 // loop_footer
            %s181 = sadd.s32 1, %s177
          $region122: #{decoder_forward.1} parent=115 // loop_footer_branch
            %176 = sbr.rel target = $region118
          $region123: #{decoder_forward.1} parent=115 // loop_exit
            _
        $region116: #{decoder_forward.1} parent=100 // pred_fallthru
          _
      $region101: #{decoder_forward.1} parent=36 // pred_fallthru
        _
      // Predicated region
      $region102: #{decoder_forward.1} parent=36 // pred_check
        _
      $region103: #{decoder_forward.1} parent=36 // pred_check_branch
        %159 = sbr.rel (0) target = $region105
      $region104: #{decoder_forward.1} parent=36 // pred_region
        %s161 = ssub.s32 2, 1
        loop: start=0, step=1, limit=1
        $region106: #{decoder_forward.1} parent=104 // loop_pre_header
          _
        $region107: #{decoder_forward.1} parent=104 // loop_header
          %s163 = sphi 0, %s167
          %p164 = scmp.ge.s32.totalorder %s163, 1
          %s168 = sphi %s153, %s153
          %s169 = sphi %s154, %s154
        $region108: #{decoder_forward.1} parent=104 // loop_header_branch
          %166 = sbr.rel (%p164) target = $region112
        $region109: #{decoder_forward.1} parent=104 // loop_body
          %v170 = vld [vmem:[%s168] sm:%s161]
          %171 = vst [vmem:[%s169] sm:%s161] %v170
        $region110: #{decoder_forward.1} parent=104 // loop_footer
          %s167 = sadd.s32 1, %s163
        $region111: #{decoder_forward.1} parent=104 // loop_footer_branch
          %162 = sbr.rel target = $region107
        $region112: #{decoder_forward.1} parent=104 // loop_exit
          _
      $region105: #{decoder_forward.1} parent=36 // pred_fallthru
        _
      // Predicated region
      $region124: #{decoder_forward.1} parent=36 // pred_check
        _
      $region125: #{decoder_forward.1} parent=36 // pred_check_branch
        %188 = sbr.rel (0) target = $region127
      $region126: #{decoder_forward.1} parent=36 // pred_region
        %189 = vsyncadd %s155, 16
      $region127: #{decoder_forward.1} parent=36 // pred_fallthru
        _
      %s190 = scalar_lea.vmem %s1, %s76
      %s191 = scalar_lea.vmem [#allocation2], 3
      %s192 = scalar_lea.sflag [#allocation5], 3
      // Predicated region
      $region128: #{decoder_forward.1} parent=36 // pred_check
        _
      $region129: #{decoder_forward.1} parent=36 // pred_check_branch
        %194 = sbr.rel target = $region131
      $region130: #{decoder_forward.1} parent=36 // pred_region
        // Predicated region
        $region143: #{decoder_forward.1} parent=130 // pred_check
          _
        $region144: #{decoder_forward.1} parent=130 // pred_check_branch
          %210 = sbr.rel (0) target = $region146
        $region145: #{decoder_forward.1} parent=130 // pred_region
          %s212 = ssub.s32 2, 1
          loop: start=0, step=1, limit=1
          $region147: #{decoder_forward.1} parent=145 // loop_pre_header
            _
          $region148: #{decoder_forward.1} parent=145 // loop_header
            %s214 = sphi 0, %s218
            %p215 = scmp.ge.s32.totalorder %s214, 1
            %s219 = sphi %s190, %s190
            %s220 = sphi %s191, %s191
          $region149: #{decoder_forward.1} parent=145 // loop_header_branch
            %217 = sbr.rel (%p215) target = $region153
          $region150: #{decoder_forward.1} parent=145 // loop_body
            %v221 = vld [vmem:[%s219] sm:%s212]
            %222 = vst [vmem:[%s220] sm:%s212] %v221
          $region151: #{decoder_forward.1} parent=145 // loop_footer
            %s218 = sadd.s32 1, %s214
          $region152: #{decoder_forward.1} parent=145 // loop_footer_branch
            %213 = sbr.rel target = $region148
          $region153: #{decoder_forward.1} parent=145 // loop_exit
            _
        $region146: #{decoder_forward.1} parent=130 // pred_fallthru
          _
      $region131: #{decoder_forward.1} parent=36 // pred_fallthru
        _
      // Predicated region
      $region132: #{decoder_forward.1} parent=36 // pred_check
        _
      $region133: #{decoder_forward.1} parent=36 // pred_check_branch
        %196 = sbr.rel (0) target = $region135
      $region134: #{decoder_forward.1} parent=36 // pred_region
        %s198 = ssub.s32 2, 1
        loop: start=0, step=1, limit=1
        $region136: #{decoder_forward.1} parent=134 // loop_pre_header
          _
        $region137: #{decoder_forward.1} parent=134 // loop_header
          %s200 = sphi 0, %s204
          %p201 = scmp.ge.s32.totalorder %s200, 1
          %s205 = sphi %s190, %s190
          %s206 = sphi %s191, %s191
        $region138: #{decoder_forward.1} parent=134 // loop_header_branch
          %203 = sbr.rel (%p201) target = $region142
        $region139: #{decoder_forward.1} parent=134 // loop_body
          %v207 = vld [vmem:[%s205] sm:%s198]
          %208 = vst [vmem:[%s206] sm:%s198] %v207
        $region140: #{decoder_forward.1} parent=134 // loop_footer
          %s204 = sadd.s32 1, %s200
        $region141: #{decoder_forward.1} parent=134 // loop_footer_branch
          %199 = sbr.rel target = $region137
        $region142: #{decoder_forward.1} parent=134 // loop_exit
          _
      $region135: #{decoder_forward.1} parent=36 // pred_fallthru
        _
      // Predicated region
      $region154: #{decoder_forward.1} parent=36 // pred_check
        _
      $region155: #{decoder_forward.1} parent=36 // pred_check_branch
        %225 = sbr.rel (0) target = $region157
      $region156: #{decoder_forward.1} parent=36 // pred_region
        %226 = vsyncadd %s192, 16
      $region157: #{decoder_forward.1} parent=36 // pred_fallthru
        _
      %s227 = scalar_lea.vmem %s1, %s77
      %s228 = scalar_lea.vmem [#allocation2], 4
      %s229 = scalar_lea.sflag [#allocation5], 4
      // Predicated region
      $region158: #{decoder_forward.1} parent=36 // pred_check
        _
      $region159: #{decoder_forward.1} parent=36 // pred_check_branch
        %231 = sbr.rel target = $region161
      $region160: #{decoder_forward.1} parent=36 // pred_region
        // Predicated region
        $region173: #{decoder_forward.1} parent=160 // pred_check
          _
        $region174: #{decoder_forward.1} parent=160 // pred_check_branch
          %247 = sbr.rel (0) target = $region176
        $region175: #{decoder_forward.1} parent=160 // pred_region
          %s249 = ssub.s32 2, 1
          loop: start=0, step=1, limit=1
          $region177: #{decoder_forward.1} parent=175 // loop_pre_header
            _
          $region178: #{decoder_forward.1} parent=175 // loop_header
            %s251 = sphi 0, %s255
            %p252 = scmp.ge.s32.totalorder %s251, 1
            %s256 = sphi %s227, %s227
            %s257 = sphi %s228, %s228
          $region179: #{decoder_forward.1} parent=175 // loop_header_branch
            %254 = sbr.rel (%p252) target = $region183
          $region180: #{decoder_forward.1} parent=175 // loop_body
            %v258 = vld [vmem:[%s256] sm:%s249]
            %259 = vst [vmem:[%s257] sm:%s249] %v258
          $region181: #{decoder_forward.1} parent=175 // loop_footer
            %s255 = sadd.s32 1, %s251
          $region182: #{decoder_forward.1} parent=175 // loop_footer_branch
            %250 = sbr.rel target = $region178
          $region183: #{decoder_forward.1} parent=175 // loop_exit
            _
        $region176: #{decoder_forward.1} parent=160 // pred_fallthru
          _
      $region161: #{decoder_forward.1} parent=36 // pred_fallthru
        _
      // Predicated region
      $region162: #{decoder_forward.1} parent=36 // pred_check
        _
      $region163: #{decoder_forward.1} parent=36 // pred_check_branch
        %233 = sbr.rel (0) target = $region165
      $region164: #{decoder_forward.1} parent=36 // pred_region
        %s235 = ssub.s32 2, 1
        loop: start=0, step=1, limit=1
        $region166: #{decoder_forward.1} parent=164 // loop_pre_header
          _
        $region167: #{decoder_forward.1} parent=164 // loop_header
          %s237 = sphi 0, %s241
          %p238 = scmp.ge.s32.totalorder %s237, 1
          %s242 = sphi %s227, %s227
          %s243 = sphi %s228, %s228
        $region168: #{decoder_forward.1} parent=164 // loop_header_branch
          %240 = sbr.rel (%p238) target = $region172
        $region169: #{decoder_forward.1} parent=164 // loop_body
          %v244 = vld [vmem:[%s242] sm:%s235]
          %245 = vst [vmem:[%s243] sm:%s235] %v244
        $region170: #{decoder_forward.1} parent=164 // loop_footer
          %s241 = sadd.s32 1, %s237
        $region171: #{decoder_forward.1} parent=164 // loop_footer_branch
          %236 = sbr.rel target = $region167
        $region172: #{decoder_forward.1} parent=164 // loop_exit
          _
      $region165: #{decoder_forward.1} parent=36 // pred_fallthru
        _
      // Predicated region
      $region184: #{decoder_forward.1} parent=36 // pred_check
        _
      $region185: #{decoder_forward.1} parent=36 // pred_check_branch
        %262 = sbr.rel (0) target = $region187
      $region186: #{decoder_forward.1} parent=36 // pred_region
        %263 = vsyncadd %s229, 16
      $region187: #{decoder_forward.1} parent=36 // pred_fallthru
        _
      %s264 = scalar_lea.vmem %s1, %s78
      %s265 = scalar_lea.vmem [#allocation2], 5
      %s266 = scalar_lea.sflag [#allocation5], 5
      // Predicated region
      $region188: #{decoder_forward.1} parent=36 // pred_check
        _
      $region189: #{decoder_forward.1} parent=36 // pred_check_branch
        %268 = sbr.rel target = $region191
      $region190: #{decoder_forward.1} parent=36 // pred_region
        // Predicated region
        $region203: #{decoder_forward.1} parent=190 // pred_check
          _
        $region204: #{decoder_forward.1} parent=190 // pred_check_branch
          %284 = sbr.rel (0) target = $region206
        $region205: #{decoder_forward.1} parent=190 // pred_region
          %s286 = ssub.s32 2, 1
          loop: start=0, step=1, limit=1
          $region207: #{decoder_forward.1} parent=205 // loop_pre_header
            _
          $region208: #{decoder_forward.1} parent=205 // loop_header
            %s288 = sphi 0, %s292
            %p289 = scmp.ge.s32.totalorder %s288, 1
            %s293 = sphi %s264, %s264
            %s294 = sphi %s265, %s265
          $region209: #{decoder_forward.1} parent=205 // loop_header_branch
            %291 = sbr.rel (%p289) target = $region213
          $region210: #{decoder_forward.1} parent=205 // loop_body
            %v295 = vld [vmem:[%s293] sm:%s286]
            %296 = vst [vmem:[%s294] sm:%s286] %v295
          $region211: #{decoder_forward.1} parent=205 // loop_footer
            %s292 = sadd.s32 1, %s288
          $region212: #{decoder_forward.1} parent=205 // loop_footer_branch
            %287 = sbr.rel target = $region208
          $region213: #{decoder_forward.1} parent=205 // loop_exit
            _
        $region206: #{decoder_forward.1} parent=190 // pred_fallthru
          _
      $region191: #{decoder_forward.1} parent=36 // pred_fallthru
        _
      // Predicated region
      $region192: #{decoder_forward.1} parent=36 // pred_check
        _
      $region193: #{decoder_forward.1} parent=36 // pred_check_branch
        %270 = sbr.rel (0) target = $region195
      $region194: #{decoder_forward.1} parent=36 // pred_region
        %s272 = ssub.s32 2, 1
        loop: start=0, step=1, limit=1
        $region196: #{decoder_forward.1} parent=194 // loop_pre_header
          _
        $region197: #{decoder_forward.1} parent=194 // loop_header
          %s274 = sphi 0, %s278
          %p275 = scmp.ge.s32.totalorder %s274, 1
          %s279 = sphi %s264, %s264
          %s280 = sphi %s265, %s265
        $region198: #{decoder_forward.1} parent=194 // loop_header_branch
          %277 = sbr.rel (%p275) target = $region202
        $region199: #{decoder_forward.1} parent=194 // loop_body
          %v281 = vld [vmem:[%s279] sm:%s272]
          %282 = vst [vmem:[%s280] sm:%s272] %v281
        $region200: #{decoder_forward.1} parent=194 // loop_footer
          %s278 = sadd.s32 1, %s274
        $region201: #{decoder_forward.1} parent=194 // loop_footer_branch
          %273 = sbr.rel target = $region197
        $region202: #{decoder_forward.1} parent=194 // loop_exit
          _
      $region195: #{decoder_forward.1} parent=36 // pred_fallthru
        _
      // Predicated region
      $region214: #{decoder_forward.1} parent=36 // pred_check
        _
      $region215: #{decoder_forward.1} parent=36 // pred_check_branch
        %299 = sbr.rel (0) target = $region217
      $region216: #{decoder_forward.1} parent=36 // pred_region
        %300 = vsyncadd %s266, 16
      $region217: #{decoder_forward.1} parent=36 // pred_fallthru
        _
      %s301 = scalar_lea.vmem %s1, %s79
      %s302 = scalar_lea.vmem [#allocation2], 6
      %s303 = scalar_lea.sflag [#allocation5], 6
      // Predicated region
      $region218: #{decoder_forward.1} parent=36 // pred_check
        _
      $region219: #{decoder_forward.1} parent=36 // pred_check_branch
        %305 = sbr.rel target = $region221
      $region220: #{decoder_forward.1} parent=36 // pred_region
        // Predicated region
        $region233: #{decoder_forward.1} parent=220 // pred_check
          _
        $region234: #{decoder_forward.1} parent=220 // pred_check_branch
          %321 = sbr.rel (0) target = $region236
        $region235: #{decoder_forward.1} parent=220 // pred_region
          %s323 = ssub.s32 2, 1
          loop: start=0, step=1, limit=1
          $region237: #{decoder_forward.1} parent=235 // loop_pre_header
            _
          $region238: #{decoder_forward.1} parent=235 // loop_header
            %s325 = sphi 0, %s329
            %p326 = scmp.ge.s32.totalorder %s325, 1
            %s330 = sphi %s301, %s301
            %s331 = sphi %s302, %s302
          $region239: #{decoder_forward.1} parent=235 // loop_header_branch
            %328 = sbr.rel (%p326) target = $region243
          $region240: #{decoder_forward.1} parent=235 // loop_body
            %v332 = vld [vmem:[%s330] sm:%s323]
            %333 = vst [vmem:[%s331] sm:%s323] %v332
          $region241: #{decoder_forward.1} parent=235 // loop_footer
            %s329 = sadd.s32 1, %s325
          $region242: #{decoder_forward.1} parent=235 // loop_footer_branch
            %324 = sbr.rel target = $region238
          $region243: #{decoder_forward.1} parent=235 // loop_exit
            _
        $region236: #{decoder_forward.1} parent=220 // pred_fallthru
          _
      $region221: #{decoder_forward.1} parent=36 // pred_fallthru
        _
      // Predicated region
      $region222: #{decoder_forward.1} parent=36 // pred_check
        _
      $region223: #{decoder_forward.1} parent=36 // pred_check_branch
        %307 = sbr.rel (0) target = $region225
      $region224: #{decoder_forward.1} parent=36 // pred_region
        %s309 = ssub.s32 2, 1
        loop: start=0, step=1, limit=1
        $region226: #{decoder_forward.1} parent=224 // loop_pre_header
          _
        $region227: #{decoder_forward.1} parent=224 // loop_header
          %s311 = sphi 0, %s315
          %p312 = scmp.ge.s32.totalorder %s311, 1
          %s316 = sphi %s301, %s301
          %s317 = sphi %s302, %s302
        $region228: #{decoder_forward.1} parent=224 // loop_header_branch
          %314 = sbr.rel (%p312) target = $region232
        $region229: #{decoder_forward.1} parent=224 // loop_body
          %v318 = vld [vmem:[%s316] sm:%s309]
          %319 = vst [vmem:[%s317] sm:%s309] %v318
        $region230: #{decoder_forward.1} parent=224 // loop_footer
          %s315 = sadd.s32 1, %s311
        $region231: #{decoder_forward.1} parent=224 // loop_footer_branch
          %310 = sbr.rel target = $region227
        $region232: #{decoder_forward.1} parent=224 // loop_exit
          _
      $region225: #{decoder_forward.1} parent=36 // pred_fallthru
        _
      // Predicated region
      $region244: #{decoder_forward.1} parent=36 // pred_check
        _
      $region245: #{decoder_forward.1} parent=36 // pred_check_branch
        %336 = sbr.rel (0) target = $region247
      $region246: #{decoder_forward.1} parent=36 // pred_region
        %337 = vsyncadd %s303, 16
      $region247: #{decoder_forward.1} parent=36 // pred_fallthru
        _
      %s338 = scalar_lea.vmem %s1, %s80
      %s339 = scalar_lea.vmem [#allocation2], 7
      %s340 = scalar_lea.sflag [#allocation5], 7
      // Predicated region
      $region248: #{decoder_forward.1} parent=36 // pred_check
        _
      $region249: #{decoder_forward.1} parent=36 // pred_check_branch
        %342 = sbr.rel target = $region251
      $region250: #{decoder_forward.1} parent=36 // pred_region
        // Predicated region
        $region263: #{decoder_forward.1} parent=250 // pred_check
          _
        $region264: #{decoder_forward.1} parent=250 // pred_check_branch
          %358 = sbr.rel (0) target = $region266
        $region265: #{decoder_forward.1} parent=250 // pred_region
          %s360 = ssub.s32 2, 1
          loop: start=0, step=1, limit=1
          $region267: #{decoder_forward.1} parent=265 // loop_pre_header
            _
          $region268: #{decoder_forward.1} parent=265 // loop_header
            %s362 = sphi 0, %s366
            %p363 = scmp.ge.s32.totalorder %s362, 1
            %s367 = sphi %s338, %s338
            %s368 = sphi %s339, %s339
          $region269: #{decoder_forward.1} parent=265 // loop_header_branch
            %365 = sbr.rel (%p363) target = $region273
          $region270: #{decoder_forward.1} parent=265 // loop_body
            %v369 = vld [vmem:[%s367] sm:%s360]
            %370 = vst [vmem:[%s368] sm:%s360] %v369
          $region271: #{decoder_forward.1} parent=265 // loop_footer
            %s366 = sadd.s32 1, %s362
          $region272: #{decoder_forward.1} parent=265 // loop_footer_branch
            %361 = sbr.rel target = $region268
          $region273: #{decoder_forward.1} parent=265 // loop_exit
            _
        $region266: #{decoder_forward.1} parent=250 // pred_fallthru
          _
      $region251: #{decoder_forward.1} parent=36 // pred_fallthru
        _
      // Predicated region
      $region252: #{decoder_forward.1} parent=36 // pred_check
        _
      $region253: #{decoder_forward.1} parent=36 // pred_check_branch
        %344 = sbr.rel (0) target = $region255
      $region254: #{decoder_forward.1} parent=36 // pred_region
        %s346 = ssub.s32 2, 1
        loop: start=0, step=1, limit=1
        $region256: #{decoder_forward.1} parent=254 // loop_pre_header
          _
        $region257: #{decoder_forward.1} parent=254 // loop_header
          %s348 = sphi 0, %s352
          %p349 = scmp.ge.s32.totalorder %s348, 1
          %s353 = sphi %s338, %s338
          %s354 = sphi %s339, %s339
        $region258: #{decoder_forward.1} parent=254 // loop_header_branch
          %351 = sbr.rel (%p349) target = $region262
        $region259: #{decoder_forward.1} parent=254 // loop_body
          %v355 = vld [vmem:[%s353] sm:%s346]
          %356 = vst [vmem:[%s354] sm:%s346] %v355
        $region260: #{decoder_forward.1} parent=254 // loop_footer
          %s352 = sadd.s32 1, %s348
        $region261: #{decoder_forward.1} parent=254 // loop_footer_branch
          %347 = sbr.rel target = $region257
        $region262: #{decoder_forward.1} parent=254 // loop_exit
          _
      $region255: #{decoder_forward.1} parent=36 // pred_fallthru
        _
      // Predicated region
      $region274: #{decoder_forward.1} parent=36 // pred_check
        _
      $region275: #{decoder_forward.1} parent=36 // pred_check_branch
        %373 = sbr.rel (0) target = $region277
      $region276: #{decoder_forward.1} parent=36 // pred_region
        %374 = vsyncadd %s340, 16
      $region277: #{decoder_forward.1} parent=36 // pred_fallthru
        _
      %s375 = smul.u32 1, 1
      %s376 = sshll.u32 %s375, 4
      %377 = dma.done [#allocation5], %s376
      %s378 = sshll.u32 %s375, 4
      %379 = dma.done %s118, %s378
      %s380 = sshll.u32 %s375, 4
      %381 = dma.done %s155, %s380
      %s382 = sshll.u32 %s375, 4
      %383 = dma.done %s192, %s382
      %s384 = sshll.u32 %s375, 4
      %385 = dma.done %s229, %s384
      %s386 = sshll.u32 %s375, 4
      %387 = dma.done %s266, %s386
      %s388 = sshll.u32 %s375, 4
      %389 = dma.done %s303, %s388
      %s390 = sshll.u32 %s375, 4
      %391 = dma.done %s340, %s390
      %v392 = vld [vmem:[#allocation2] sm:$0xff]
      %v393 = vpack.c.bf16 %v392, %v392
      %vm394 = vcmask 125952
      %395 = vst.msk [vmem:[#allocation3] sm:$0xf] %vm394, %v393
      %v396 = vld [vmem:[%s2] sm:$0xff]
      %v397 = vpack.c.bf16 %v396, %v396
      %399 = vrot.lane.b32.xlu0 %v397, 16
      %v400 = vpop.permute.xlu0 %399
      %vm402 = vcmask 1043584
      %403 = vst.msk [vmem:[#allocation3] sm:$0xf] %vm402, %v400
      %v404 = vld [vmem:[#allocation3] sm:$0xf]
      %v405 = vld [vmem:[#allocation8] sm:$0xff]
      %v406 = vld [vmem:[#allocation8 + $0x8] sm:$0xff]
      %v407 = vld [vmem:[#allocation8 + $0x10] sm:$0xff]
      %v408 = vld [vmem:[#allocation8 + $0x18] sm:$0xff]
      %v409 = vld [vmem:[#allocation8 + $0x20] sm:$0xff]
      %v410 = vld [vmem:[#allocation8 + $0x28] sm:$0xff]
      %v411 = vld [vmem:[#allocation8 + $0x30] sm:$0xff]
      %v412 = vld [vmem:[#allocation8 + $0x38] sm:$0xff]
      %v413 = vld [vmem:[#allocation8 + $0x40] sm:$0xff]
      %v414 = vld [vmem:[#allocation8 + $0x48] sm:$0xff]
      %v415 = vld [vmem:[#allocation8 + $0x50] sm:$0xff]
      %v416 = vld [vmem:[#allocation8 + $0x58] sm:$0xff]
      %v417 = vld [vmem:[#allocation8 + $0x60] sm:$0xff]
      %v418 = vld [vmem:[#allocation8 + $0x68] sm:$0xff]
      %v419 = vld [vmem:[#allocation8 + $0x70] sm:$0xff]
      %v420 = vld [vmem:[#allocation8 + $0x78] sm:$0xff]
      %v421 = vld [vmem:[#allocation8 + $0x80] sm:$0xff]
      %v422 = vld [vmem:[#allocation8 + $0x88] sm:$0xff]
      %v423 = vld [vmem:[#allocation8 + $0x90] sm:$0xff]
      %v424 = vld [vmem:[#allocation8 + $0x98] sm:$0xff]
      %v425 = vld [vmem:[#allocation8 + $0xa0] sm:$0xff]
      %v426 = vld [vmem:[#allocation8 + $0xa8] sm:$0xff]
      %v427 = vld [vmem:[#allocation8 + $0xb0] sm:$0xff]
      %v428 = vld [vmem:[#allocation8 + $0xb8] sm:$0xff]
      %v429 = vld [vmem:[#allocation8 + $0xc0] sm:$0xff]
      %v430 = vld [vmem:[#allocation8 + $0xc8] sm:$0xff]
      %v431 = vld [vmem:[#allocation8 + $0xd0] sm:$0xff]
      %v432 = vld [vmem:[#allocation8 + $0xd8] sm:$0xff]
      %v433 = vld [vmem:[#allocation8 + $0xe0] sm:$0xff]
      %v434 = vld [vmem:[#allocation8 + $0xe8] sm:$0xff]
      %v435 = vld [vmem:[#allocation8 + $0xf0] sm:$0xff]
      %v436 = vld [vmem:[#allocation8 + $0xf8] sm:$0xff]
      %v437 = vld [vmem:[%s5] sm:$0xf]
      %v439 = vperm.slane %v437, 0
      %v440 = vperm.slane %v437, 1
      %v441 = vperm.slane %v437, 2
      %v442 = vperm.slane %v437, 3
      %v479 = vunpack.c.l.b16 %v405
      %v480 = vunpack.c.h.b16 %v405
      %v481 = vunpack.c.l.b16 %v406
      %v482 = vunpack.c.h.b16 %v406
      %v483 = vunpack.c.l.b16 %v407
      %v484 = vunpack.c.h.b16 %v407
      %v485 = vunpack.c.l.b16 %v408
      %v486 = vunpack.c.h.b16 %v408
      %v487 = vunpack.c.l.b16 %v409
      %v488 = vunpack.c.h.b16 %v409
      %v489 = vunpack.c.l.b16 %v410
      %v490 = vunpack.c.h.b16 %v410
      %v491 = vunpack.c.l.b16 %v411
      %v492 = vunpack.c.h.b16 %v411
      %v493 = vunpack.c.l.b16 %v412
      %v494 = vunpack.c.h.b16 %v412
      %v495 = vunpack.c.l.b16 %v413
      %v496 = vunpack.c.h.b16 %v413
      %v497 = vunpack.c.l.b16 %v414
      %v498 = vunpack.c.h.b16 %v414
      %v499 = vunpack.c.l.b16 %v415
      %v500 = vunpack.c.h.b16 %v415
      %v501 = vunpack.c.l.b16 %v416
      %v502 = vunpack.c.h.b16 %v416
      %v503 = vunpack.c.l.b16 %v417
      %v504 = vunpack.c.h.b16 %v417
      %v505 = vunpack.c.l.b16 %v418
      %v506 = vunpack.c.h.b16 %v418
      %v507 = vunpack.c.l.b16 %v419
      %v508 = vunpack.c.h.b16 %v419
      %v509 = vunpack.c.l.b16 %v420
      %v510 = vunpack.c.h.b16 %v420
      %v511 = vunpack.c.l.b16 %v421
      %v512 = vunpack.c.h.b16 %v421
      %v513 = vunpack.c.l.b16 %v422
      %v514 = vunpack.c.h.b16 %v422
      %v515 = vunpack.c.l.b16 %v423
      %v516 = vunpack.c.h.b16 %v423
      %v517 = vunpack.c.l.b16 %v424
      %v518 = vunpack.c.h.b16 %v424
      %v519 = vunpack.c.l.b16 %v425
      %v520 = vunpack.c.h.b16 %v425
      %v521 = vunpack.c.l.b16 %v426
      %v522 = vunpack.c.h.b16 %v426
      %v523 = vunpack.c.l.b16 %v427
      %v524 = vunpack.c.h.b16 %v427
      %v525 = vunpack.c.l.b16 %v428
      %v526 = vunpack.c.h.b16 %v428
      %v527 = vunpack.c.l.b16 %v429
      %v528 = vunpack.c.h.b16 %v429
      %v529 = vunpack.c.l.b16 %v430
      %v530 = vunpack.c.h.b16 %v430
      %v531 = vunpack.c.l.b16 %v431
      %v532 = vunpack.c.h.b16 %v431
      %v533 = vunpack.c.l.b16 %v432
      %v534 = vunpack.c.h.b16 %v432
      %v535 = vunpack.c.l.b16 %v433
      %v536 = vunpack.c.h.b16 %v433
      %v537 = vunpack.c.l.b16 %v434
      %v538 = vunpack.c.h.b16 %v434
      %v539 = vunpack.c.l.b16 %v435
      %v540 = vunpack.c.h.b16 %v435
      %v541 = vunpack.c.l.b16 %v436
      %v542 = vunpack.c.h.b16 %v436
      %v543 = vpack.c.b16 %v483, %v479
      %v544 = vpack.c.b16 %v484, %v480
      %v545 = vpack.c.b16 %v485, %v481
      %v546 = vpack.c.b16 %v486, %v482
      %v547 = vpack.c.b16 %v491, %v487
      %v548 = vpack.c.b16 %v492, %v488
      %v549 = vpack.c.b16 %v493, %v489
      %v550 = vpack.c.b16 %v494, %v490
      %v551 = vpack.c.b16 %v499, %v495
      %v552 = vpack.c.b16 %v500, %v496
      %v553 = vpack.c.b16 %v501, %v497
      %v554 = vpack.c.b16 %v502, %v498
      %v555 = vpack.c.b16 %v507, %v503
      %v556 = vpack.c.b16 %v508, %v504
      %v557 = vpack.c.b16 %v509, %v505
      %v558 = vpack.c.b16 %v510, %v506
      %v559 = vpack.c.b16 %v515, %v511
      %v560 = vpack.c.b16 %v516, %v512
      %v561 = vpack.c.b16 %v517, %v513
      %v562 = vpack.c.b16 %v518, %v514
      %v563 = vpack.c.b16 %v523, %v519
      %v564 = vpack.c.b16 %v524, %v520
      %v565 = vpack.c.b16 %v525, %v521
      %v566 = vpack.c.b16 %v526, %v522
      %v567 = vpack.c.b16 %v531, %v527
      %v568 = vpack.c.b16 %v532, %v528
      %v569 = vpack.c.b16 %v533, %v529
      %v570 = vpack.c.b16 %v534, %v530
      %v571 = vpack.c.b16 %v539, %v535
      %v572 = vpack.c.b16 %v540, %v536
      %v573 = vpack.c.b16 %v541, %v537
      %v574 = vpack.c.b16 %v542, %v538
      %607 = vmatpush.bf16.msra.mxu0 %v571
      %608 = vmatpush.bf16.msra.mxu0 %v567
      %609 = vmatpush.bf16.msra.mxu0 %v563
      %610 = vmatpush.bf16.msra.mxu0 %v559
      %611 = vmatpush.bf16.msra.mxu0 %v555
      %612 = vmatpush.bf16.msra.mxu0 %v551
      %613 = vmatpush.bf16.msra.mxu0 %v547
      %614 = vmatpush.bf16.msra.mxu0 %v543
      %615 = vmatmul.bf16.gmra.mxu0 %v404
      %v616 = vpop.f32.mrf.mxu0
      %v617 = vadd.f32 %v439, %v616
      %v618 = vpop.f32.mrf.mxu0
      %619 = vdwg.mxu0
      %620 = vmatpush.bf16.msra.mxu0 %v572
      %621 = vmatpush.bf16.msra.mxu0 %v568
      %622 = vmatpush.bf16.msra.mxu0 %v564
      %623 = vmatpush.bf16.msra.mxu0 %v560
      %624 = vmatpush.bf16.msra.mxu0 %v556
      %625 = vmatpush.bf16.msra.mxu0 %v552
      %626 = vmatpush.bf16.msra.mxu0 %v548
      %627 = vmatpush.bf16.msra.mxu0 %v544
      %628 = vmatmul.bf16.gmra.mxu0 %v404
      %v629 = vpop.f32.mrf.mxu0
      %v630 = vadd.f32 %v440, %v629
      %v631 = vpop.f32.mrf.mxu0
      %632 = vdwg.mxu0
      %633 = vmatpush.bf16.msra.mxu0 %v573
      %634 = vmatpush.bf16.msra.mxu0 %v569
      %635 = vmatpush.bf16.msra.mxu0 %v565
      %636 = vmatpush.bf16.msra.mxu0 %v561
      %637 = vmatpush.bf16.msra.mxu0 %v557
      %638 = vmatpush.bf16.msra.mxu0 %v553
      %639 = vmatpush.bf16.msra.mxu0 %v549
      %640 = vmatpush.bf16.msra.mxu0 %v545
      %641 = vmatmul.bf16.gmra.mxu0 %v404
      %v642 = vpop.f32.mrf.mxu0
      %v643 = vadd.f32 %v441, %v642
      %v644 = vpop.f32.mrf.mxu0
      %645 = vdwg.mxu0
      %646 = vmatpush.bf16.msra.mxu0 %v574
      %647 = vmatpush.bf16.msra.mxu0 %v570
      %648 = vmatpush.bf16.msra.mxu0 %v566
      %649 = vmatpush.bf16.msra.mxu0 %v562
      %650 = vmatpush.bf16.msra.mxu0 %v558
      %651 = vmatpush.bf16.msra.mxu0 %v554
      %652 = vmatpush.bf16.msra.mxu0 %v550
      %653 = vmatpush.bf16.msra.mxu0 %v546
      %654 = vmatmul.bf16.gmra.mxu0 %v404
      %v655 = vpop.f32.mrf.mxu0
      %v656 = vadd.f32 %v442, %v655
      %v657 = vpop.f32.mrf.mxu0
      %658 = vdwg.mxu0
      %v659 = vxor.u32 %v617, 2147483648
      %v660 = vmul.f32 %v659, 1.442695
      %v661 = vpow.pop %v660
      %v662 = vadd.f32 %v661, 1.0
      %v663 = vrcp.pop %v662
      %v664 = vmul.f32 %v662, %v663
      %v665 = vsub.f32 1.0, %v664
      %v666 = vmul.f32 %v663, %v665
      %v667 = vadd.f32 %v663, %v666
      %vm668 = vweird.f32 %v662
      %vm669 = vweird.f32 %v663
      %vm670 = vmor %vm668, %vm669
      %v671 = vsel %vm670, %v663, %v667
      %v672 = vand.u32 2147483647, %v662
      %vm673 = vcmp.eq.f32.partialorder %v672, 8.507059e+37
      %v674 = vand.u32 %v662, 2147483648
      %v675 = vor.u32 1.1754944e-38, %v674
      %v676 = vsel %vm673, %v675, %v671
      %v677 = vmul.f32 1.0, %v676
      %v678 = vxor.u32 %v630, 2147483648
      %v679 = vmul.f32 %v678, 1.442695
      %v680 = vpow.pop %v679
      %v681 = vadd.f32 %v680, 1.0
      %v682 = vrcp.pop %v681
      %v683 = vmul.f32 %v681, %v682
      %v684 = vsub.f32 1.0, %v683
      %v685 = vmul.f32 %v682, %v684
      %v686 = vadd.f32 %v682, %v685
      %vm687 = vweird.f32 %v681
      %vm688 = vweird.f32 %v682
      %vm689 = vmor %vm687, %vm688
      %v690 = vsel %vm689, %v682, %v686
      %v691 = vand.u32 2147483647, %v681
      %vm692 = vcmp.eq.f32.partialorder %v691, 8.507059e+37
      %v693 = vand.u32 %v681, 2147483648
      %v694 = vor.u32 1.1754944e-38, %v693
      %v695 = vsel %vm692, %v694, %v690
      %v696 = vmul.f32 1.0, %v695
      %v697 = vtanh.pop %v643
      %v698 = vxor.u32 %v656, 2147483648
      %v699 = vmul.f32 %v698, 1.442695
      %v700 = vpow.pop %v699
      %v701 = vadd.f32 %v700, 1.0
      %v702 = vrcp.pop %v701
      %v703 = vmul.f32 %v701, %v702
      %v704 = vsub.f32 1.0, %v703
      %v705 = vmul.f32 %v702, %v704
      %v706 = vadd.f32 %v702, %v705
      %vm707 = vweird.f32 %v701
      %vm708 = vweird.f32 %v702
      %vm709 = vmor %vm707, %vm708
      %v710 = vsel %vm709, %v702, %v706
      %v711 = vand.u32 2147483647, %v701
      %vm712 = vcmp.eq.f32.partialorder %v711, 8.507059e+37
      %v713 = vand.u32 %v701, 2147483648
      %v714 = vor.u32 1.1754944e-38, %v713
      %v715 = vsel %vm712, %v714, %v710
      %v716 = vmul.f32 1.0, %v715
      %v717 = vld [vmem:[%s3] sm:$0xff]
      %v718 = vmul.f32 %v696, %v717
      %v719 = vmul.f32 %v677, %v697
      %v720 = vadd.f32 %v718, %v719
      %v721 = vtanh.pop %v720
      %v722 = vmul.f32 %v716, %v721
      %723 = vst [vmem:[%s10] sm:$0xff] %v720
      %724 = vst [vmem:[%s9] sm:$0xff] %v722
      %v725 = vpack.c.bf16 %v722, %v722
      %726 = vst [vmem:[#allocation4] sm:$0xf] %v725
    $region37: #{decoder_forward.1} parent=1 // pred_fallthru
      _
    %v727 = vld [vmem:[#allocation4] sm:$0xf]
    %v728 = vld [vmem:[#allocation11] sm:$0xf]
    %v729 = vld [vmem:[#allocation11 + $0x4] sm:$0xf]
    %v730 = vld [vmem:[#allocation11 + $0x8] sm:$0xf]
    %v731 = vld [vmem:[#allocation11 + $0xc] sm:$0xf]
    %v732 = vld [vmem:[#allocation11 + $0x10] sm:$0xf]
    %v733 = vld [vmem:[#allocation11 + $0x14] sm:$0xf]
    %v734 = vld [vmem:[#allocation11 + $0x18] sm:$0xf]
    %v735 = vld [vmem:[#allocation11 + $0x1c] sm:$0xf]
    %v736 = vld [vmem:[#allocation11 + $0x20] sm:$0xf]
    %v737 = vld [vmem:[#allocation11 + $0x24] sm:$0xf]
    %v738 = vld [vmem:[#allocation11 + $0x28] sm:$0xf]
    %v739 = vld [vmem:[#allocation11 + $0x2c] sm:$0xf]
    %v740 = vld [vmem:[#allocation11 + $0x30] sm:$0xf]
    %v741 = vld [vmem:[#allocation11 + $0x34] sm:$0xf]
    %v742 = vld [vmem:[#allocation11 + $0x38] sm:$0xf]
    %v743 = vld [vmem:[#allocation11 + $0x3c] sm:$0xf]
    %v744 = vld [vmem:[%s7] sm:$0x1]
    %v746 = vperm.slane %v744, 0
    %v764 = vunpack.c.l.b16 %v728
    %v765 = vunpack.c.l.b16 %v729
    %v766 = vunpack.c.l.b16 %v730
    %v767 = vunpack.c.l.b16 %v731
    %v768 = vunpack.c.l.b16 %v732
    %v769 = vunpack.c.l.b16 %v733
    %v770 = vunpack.c.l.b16 %v734
    %v771 = vunpack.c.l.b16 %v735
    %v772 = vunpack.c.l.b16 %v736
    %v773 = vunpack.c.l.b16 %v737
    %v774 = vunpack.c.l.b16 %v738
    %v775 = vunpack.c.l.b16 %v739
    %v776 = vunpack.c.l.b16 %v740
    %v777 = vunpack.c.l.b16 %v741
    %v778 = vunpack.c.l.b16 %v742
    %v779 = vunpack.c.l.b16 %v743
    %v780 = vpack.c.b16 %v765, %v764
    %v781 = vpack.c.b16 %v767, %v766
    %v782 = vpack.c.b16 %v769, %v768
    %v783 = vpack.c.b16 %v771, %v770
    %v784 = vpack.c.b16 %v773, %v772
    %v785 = vpack.c.b16 %v775, %v774
    %v786 = vpack.c.b16 %v777, %v776
    %v787 = vpack.c.b16 %v779, %v778
    %796 = vmatpush.bf16.msra.mxu0 %v787
    %797 = vmatpush.bf16.msra.mxu0 %v786
    %798 = vmatpush.bf16.msra.mxu0 %v785
    %799 = vmatpush.bf16.msra.mxu0 %v784
    %800 = vmatpush.bf16.msra.mxu0 %v783
    %801 = vmatpush.bf16.msra.mxu0 %v782
    %802 = vmatpush.bf16.msra.mxu0 %v781
    %803 = vmatpush.bf16.msra.mxu0 %v780
    %804 = vmatmul.bf16.gmra.mxu0 %v727
    %v805 = vpop.f32.mrf.mxu0
    %v806 = vadd.f32 %v746, %v805
    %v807 = vpop.f32.mrf.mxu0
    %808 = vdwg.mxu0
    %809 = vst [vmem:[#allocation13] sm:$0xff] %v806
    // Predicated region
    $region278: #{decoder_forward.1} parent=1 // pred_check
      _
    $region279: #{decoder_forward.1} parent=1 // pred_check_branch
      %811 = sbr.rel (0) target = $region281
    $region280: #{decoder_forward.1} parent=1 // pred_region
      %813 = vsyncadd [#allocation10], 0
      %s815 = sshll.u32 [#allocation13], 4
      %s816 = int_to_ptr.vmem [resolvable:$true] %s815
      %s817 = sshll.u32 %s8, 4
      %s818 = int_to_ptr.hbm [resolvable:$true] %s817
      %820 = dma.vmem_to_hbm [thread:$0]  %s816, 128, %s818, [#allocation10]
    $region281: #{decoder_forward.1} parent=1 // pred_fallthru
      _
    // Predicated region
    $region282: #{decoder_forward.1} parent=1 // pred_check
      _
    $region283: #{decoder_forward.1} parent=1 // pred_check_branch
      %822 = sbr.rel (0) target = $region285
    $region284: #{decoder_forward.1} parent=1 // pred_region
      _
    $region285: #{decoder_forward.1} parent=1 // pred_fallthru
      _
    // Predicated region
    $region286: #{decoder_forward.1} parent=1 // pred_check
      _
    $region287: #{decoder_forward.1} parent=1 // pred_check_branch
      %824 = sbr.rel (0) target = $region289
    $region288: #{decoder_forward.1} parent=1 // pred_region
      _
    $region289: #{decoder_forward.1} parent=1 // pred_fallthru
      _
    // Predicated region
    $region290: #{decoder_forward.1} parent=1 // pred_check
      _
    $region291: #{decoder_forward.1} parent=1 // pred_check_branch
      %826 = sbr.rel (0) target = $region293
    $region292: #{decoder_forward.1} parent=1 // pred_region
      %828 = dma.done [#allocation10], 128
    $region293: #{decoder_forward.1} parent=1 // pred_fallthru
      _
    // Predicated region
    $region294: #{decoder_forward.1} parent=1 // pred_check
      _
    $region295: #{decoder_forward.1} parent=1 // pred_check_branch
      %830 = sbr.rel (0) target = $region297
    $region296: #{decoder_forward.1} parent=1 // pred_region
      _
    $region297: #{decoder_forward.1} parent=1 // pred_fallthru
      _
    // Predicated region
    $region298: #{decoder_forward.1} parent=1 // pred_check
      _
    $region299: #{decoder_forward.1} parent=1 // pred_check_branch
      %832 = sbr.rel (0) target = $region301
    $region300: #{decoder_forward.1} parent=1 // pred_region
      _
    $region301: #{decoder_forward.1} parent=1 // pred_fallthru
      _
    %833 = vsyncpa [#allocation9], 1
    %834 = vsyncpa [#allocation12], 1
    %835 = vsyncpa [#allocation10], 1
  %836 = vsyncmov [#allocation5]
  %s837 = vpop.sfrf %836
  %p838 = scmp.eq.s32.totalorder %s837, 0
  %p839 = pneg %p838
  %841 = shalt.err (%p839)
  %s842 = scalar_lea.sflag [#allocation5], 1
  %843 = vsyncmov %s842
  %s844 = vpop.sfrf %843
  %p845 = scmp.eq.s32.totalorder %s844, 0
  %p846 = pneg %p845
  %848 = shalt.err (%p846)
  %s849 = scalar_lea.sflag [#allocation5], 2
  %850 = vsyncmov %s849
  %s851 = vpop.sfrf %850
  %p852 = scmp.eq.s32.totalorder %s851, 0
  %p853 = pneg %p852
  %855 = shalt.err (%p853)
  %s856 = scalar_lea.sflag [#allocation5], 3
  %857 = vsyncmov %s856
  %s858 = vpop.sfrf %857
  %p859 = scmp.eq.s32.totalorder %s858, 0
  %p860 = pneg %p859
  %862 = shalt.err (%p860)
  %s863 = scalar_lea.sflag [#allocation5], 4
  %864 = vsyncmov %s863
  %s865 = vpop.sfrf %864
  %p866 = scmp.eq.s32.totalorder %s865, 0
  %p867 = pneg %p866
  %869 = shalt.err (%p867)
  %s870 = scalar_lea.sflag [#allocation5], 5
  %871 = vsyncmov %s870
  %s872 = vpop.sfrf %871
  %p873 = scmp.eq.s32.totalorder %s872, 0
  %p874 = pneg %p873
  %876 = shalt.err (%p874)
  %s877 = scalar_lea.sflag [#allocation5], 6
  %878 = vsyncmov %s877
  %s879 = vpop.sfrf %878
  %p880 = scmp.eq.s32.totalorder %s879, 0
  %p881 = pneg %p880
  %883 = shalt.err (%p881)
  %s884 = scalar_lea.sflag [#allocation5], 7
  %885 = vsyncmov %s884
  %s886 = vpop.sfrf %885
  %p887 = scmp.eq.s32.totalorder %s886, 0
  %p888 = pneg %p887
  %890 = shalt.err (%p888)

</llo_original>
